<compile_context>
chip_gen: v7x
topology: tpu7x:2x2x1
jax: 0.10.0
libtpu: 0.0.40
codegen_flags: <defaults>
</compile_context>

<pallas_src>
import math
import functools

import jax
import jax.numpy as jnp
from jax.experimental import pallas as pl
from jax.experimental.pallas import tpu as pltpu


# ----------------------------- config ---------------------------------------
B = 2          # batch
T = 8          # sequence length (== block_size)
C = 32         # n_embd
N_HEAD = 4     # n_head
HD = C // N_HEAD
LN_EPS = 1e-5
NEG_INF = -1e30   # finite large-negative for masking (safer than -inf)


# ----------------------------- kernel helpers --------------------------------
def _layer_norm(x, g, b):
    mu = jnp.mean(x, axis=-1, keepdims=True)
    var = jnp.mean((x - mu) ** 2, axis=-1, keepdims=True)
    return (x - mu) * jax.lax.rsqrt(var + LN_EPS) * g + b


def _gelu_tanh(x):
    # GELU(approximate='tanh'), matches PyTorch exactly.
    c = math.sqrt(2.0 / math.pi)
    return 0.5 * x * (1.0 + jnp.tanh(c * (x + 0.044715 * x * x * x)))


# ----------------------------- kernel ---------------------------------------
def block_kernel(x_ref,
                 ln1_g_ref, ln1_b_ref,
                 w_qkv_ref, b_qkv_ref, w_cp_ref, b_cp_ref,
                 ln2_g_ref, ln2_b_ref,
                 w_fc_ref, b_fc_ref, w_fc2_ref, b_fc2_ref,
                 out_ref,
                 *, n_head, seq_len, n_embd, bc, matmul_dtype, approx_recip):
    hd = n_embd // n_head
    g = bc * n_head                 # fused (batch-chunk, head) batch dim
    rows = bc * seq_len
    md = matmul_dtype
    scale = 1.0 / math.sqrt(hd)

    x2d = x_ref[...].reshape(rows, n_embd)            # (bc*T, C), layout-free merge

    # ---------------- x + attn(ln_1(x)) ----------------
    h1 = _layer_norm(x2d, ln1_g_ref[...], ln1_b_ref[...])             # (rows, C) f32

    # Fused QKV projection: one (rows, C) @ (C, 3C) MXU matmul, f32 accumulate.
    qkv = jnp.dot(h1.astype(md), w_qkv_ref[...],
                  preferred_element_type=jnp.float32) + b_qkv_ref[...]  # (rows, 3C)

    def split_heads(col0):
        # Intra-vreg lane slices of the fused result + leading-dim concat:
        # (rows, hd) per head -> (bc, n_head, T, hd) -> (g, T, hd).
        parts = [qkv[:, col0 + h * hd: col0 + (h + 1) * hd]
                 .reshape(bc, 1, seq_len, hd) for h in range(n_head)]
        return jnp.concatenate(parts, axis=1).reshape(g, seq_len, hd)

    q = split_heads(0) * scale          # 1/sqrt(hd) applied in f32
    k = split_heads(n_embd)
    v = split_heads(2 * n_embd)

    # Causal mask, built once per invocation.
    row = jax.lax.broadcasted_iota(jnp.int32, (seq_len, seq_len), 0)
    col = jax.lax.broadcasted_iota(jnp.int32, (seq_len, seq_len), 1)
    causal = (col <= row)[None]                                        # (1, T, T)

    att = jnp.einsum('gqd,gkd->gqk', q.astype(md), k.astype(md),
                     preferred_element_type=jnp.float32)               # (g, T, T)
    att = jnp.where(causal, att, NEG_INF)
    att_max = jnp.max(att, axis=-1, keepdims=True)
    e = jnp.exp(att - att_max)
    denom = jnp.sum(e, axis=-1, keepdims=True)
    if approx_recip:
        p = e * pl.reciprocal(denom, approx=True)     # divide on the EUP slot
    else:
        p = e / denom

    o = jnp.einsum('gqk,gkd->gqd', p.astype(md), v.astype(md),
                   preferred_element_type=jnp.float32)                 # (g, T, hd)

    # Heads back onto lanes (one relayout), then a single c_proj matmul.
    o4 = o.reshape(bc, n_head, seq_len, hd)
    o_lanes = jnp.concatenate([o4[:, h] for h in range(n_head)],
                              axis=-1).reshape(rows, n_embd)           # (rows, C)
    y = jnp.dot(o_lanes.astype(md), w_cp_ref[...],
                preferred_element_type=jnp.float32) + b_cp_ref[...]
    x1 = x2d + y

    # ---------------- x + mlp(ln_2(x)) ----------------
    h2 = _layer_norm(x1, ln2_g_ref[...], ln2_b_ref[...])
    ff = jnp.dot(h2.astype(md), w_fc_ref[...],
                 preferred_element_type=jnp.float32) + b_fc_ref[...]   # (rows, 4C)
    ff = _gelu_tanh(ff)
    ff = jnp.dot(ff.astype(md), w_fc2_ref[...],
                 preferred_element_type=jnp.float32) + b_fc2_ref[...]  # (rows, C)

    out_ref[...] = (x1 + ff).reshape(bc, seq_len, n_embd)


# ----------------------------- wrapper ---------------------------------------
def _num_tensorcores():
    """Best-effort TensorCore count per chip (v7x: 2); safe fallback to 1."""
    try:
        info = pltpu.get_tpu_info()
    except Exception:
        return 1
    for name in ("num_cores", "num_tensorcores", "tensorcores_per_chip",
                 "cores_per_chip", "core_count"):
        try:
            val = int(getattr(info, name))
        except (AttributeError, TypeError, ValueError):
            continue
        if val > 0:
            return val
    return 1


def _cost_estimate(batch, seq_len, n_embd, n_head, dtype_bytes=4):
    rows = batch * seq_len
    hd = n_embd // n_head
    flops = 2 * rows * n_embd * (3 * n_embd)                        # fused qkv
    flops += 2 * 2 * batch * n_head * seq_len * seq_len * hd        # scores + context
    flops += 2 * rows * n_embd * n_embd                             # c_proj
    flops += 2 * 2 * rows * n_embd * (4 * n_embd)                   # fc + fc2
    transcend = batch * n_head * seq_len * seq_len                  # exp
    transcend += batch * n_head * seq_len                           # recip
    transcend += rows * 4 * n_embd                                  # tanh (gelu)
    transcend += 2 * rows                                           # rsqrt (2 LNs)
    params = (2 * n_embd
              + n_embd * 3 * n_embd + 3 * n_embd
              + n_embd * n_embd + n_embd
              + 2 * n_embd
              + n_embd * 4 * n_embd + 4 * n_embd
              + 4 * n_embd * n_embd + n_embd)
    bytes_accessed = (2 * rows * n_embd + params) * dtype_bytes
    return pl.CostEstimate(flops=int(flops), transcendentals=int(transcend),
                           bytes_accessed=int(bytes_accessed))


def block_forward(x, params, *, batch_per_step=None,
                  matmul_dtype=jnp.float32, approx_recip=True):
    (ln1_g, ln1_b, w_attn, b_attn, w_cproj, b_cproj,
     ln2_g, ln2_b, w_fc, b_fc, w_fc2, b_fc2) = params

    batch, seq_len, n_embd = x.shape
    assert n_embd % N_HEAD == 0

    if batch_per_step is None:
        # Split the batch across TensorCores: v7x (2 TCs) -> 2 parallel grid steps;
        # v5e/v6e (1 TC) -> whole batch in one step (minimal per-step overhead).
        n_tc = _num_tensorcores()
        batch_per_step = max(1, batch // max(1, n_tc))
        while batch % batch_per_step:
            batch_per_step -= 1
    assert batch % batch_per_step == 0
    bc = batch_per_step
    num_steps = batch // bc

    # Matmul weights live in HBM at matmul_dtype (bf16 halves weight DMA/VMEM bytes).
    # Biases / LN params stay f32: added after the f32 accumulate / used for stats.
    weights = [ln1_g, ln1_b,
               w_attn.astype(matmul_dtype), b_attn,       # fused c_attn (C, 3C)
               w_cproj.astype(matmul_dtype), b_cproj,
               ln2_g, ln2_b,
               w_fc.astype(matmul_dtype), b_fc,
               w_fc2.astype(matmul_dtype), b_fc2]

    kernel = functools.partial(block_kernel, n_head=N_HEAD, seq_len=seq_len,
                               n_embd=n_embd, bc=bc, matmul_dtype=matmul_dtype,
                               approx_recip=approx_recip)

    def w_spec(w):
        nd = w.ndim
        return pl.BlockSpec(w.shape, lambda i, _nd=nd: (0,) * _nd)

    # TODO(synk): at production n_embd, single-buffer the constant-index weight specs
    # (pipeline_mode=pl.Buffered(1)) and set vmem_limit_bytes for v7x's 64 MiB VMEM.
    return pl.pallas_call(
        kernel,
        out_shape=jax.ShapeDtypeStruct((batch, seq_len, n_embd), jnp.float32),
        grid_spec=pltpu.PrefetchScalarGridSpec(
            num_scalar_prefetch=0,
            grid=(num_steps,),
            in_specs=[pl.BlockSpec((bc, seq_len, n_embd), lambda i: (i, 0, 0))]
                     + [w_spec(w) for w in weights],
            out_specs=pl.BlockSpec((bc, seq_len, n_embd), lambda i: (i, 0, 0)),
        ),
        compiler_params=pltpu.CompilerParams(
            dimension_semantics=("parallel",)),
        cost_estimate=_cost_estimate(batch, seq_len, n_embd, N_HEAD),
    )(x, *weights)


# ------------------------ pure-JAX reference ---------------------------------
def block_reference(x, params):
    (ln1_g, ln1_b, w_attn, b_attn, w_cproj, b_cproj,
     ln2_g, ln2_b, w_fc, b_fc, w_fc2, b_fc2) = params

    def ln(v, g, b):
        mu = jnp.mean(v, axis=-1, keepdims=True)
        var = jnp.mean((v - mu) ** 2, axis=-1, keepdims=True)
        return (v - mu) * jax.lax.rsqrt(var + LN_EPS) * g[0] + b[0]

    bsz, t, c = x.shape
    h1 = ln(x, ln1_g, ln1_b)
    qkv = h1 @ w_attn + b_attn[0]
    q, k, v = jnp.split(qkv, 3, axis=-1)
    q = q.reshape(bsz, t, N_HEAD, HD).transpose(0, 2, 1, 3)
    k = k.reshape(bsz, t, N_HEAD, HD).transpose(0, 2, 1, 3)
    v = v.reshape(bsz, t, N_HEAD, HD).transpose(0, 2, 1, 3)
    att = (q @ k.transpose(0, 1, 3, 2)) / math.sqrt(HD)
    mask = jnp.tril(jnp.ones((t, t), dtype=bool))
    att = jnp.where(mask[None, None], att, -jnp.inf)
    att = jax.nn.softmax(att, axis=-1)
    y = (att @ v).transpose(0, 2, 1, 3).reshape(bsz, t, c)
    y = y @ w_cproj + b_cproj[0]
    x1 = x + y

    h2 = ln(x1, ln2_g, ln2_b)
    cst = math.sqrt(2.0 / math.pi)
    ff = h2 @ w_fc + b_fc[0]
    ff = 0.5 * ff * (1.0 + jnp.tanh(cst * (ff + 0.044715 * ff ** 3)))
    ff = ff @ w_fc2 + b_fc2[0]
    return x1 + ff


# ----------------------------- main ------------------------------------------
if __name__ == "__main__":
    key = jax.random.PRNGKey(0)
    keys = jax.random.split(key, 16)

    def init(k, shape, scale=0.02):
        return (scale * jax.random.normal(k, shape)).astype(jnp.float32)

    # LayerNorm params (gamma ~ around 1, beta small) -- kept 2D (1, dim)
    ln1_g = 1.0 + init(keys[0], (1, C))
    ln1_b = init(keys[1], (1, C))
    ln2_g = 1.0 + init(keys[2], (1, C))
    ln2_b = init(keys[3], (1, C))
    # c_attn: Linear(C, 3C);  c_proj: Linear(C, C)  (stored (in, out): y = x @ W + b)
    w_attn = init(keys[4], (C, 3 * C))
    b_attn = init(keys[5], (1, 3 * C))
    w_cproj = init(keys[6], (C, C))
    b_cproj = init(keys[7], (1, C))
    # MLP: c_fc Linear(C, 4C), c_proj Linear(4C, C)
    w_fc = init(keys[8], (C, 4 * C))
    b_fc = init(keys[9], (1, 4 * C))
    w_fc2 = init(keys[10], (4 * C, C))
    b_fc2 = init(keys[11], (1, C))

    params = (ln1_g, ln1_b, w_attn, b_attn, w_cproj, b_cproj,
              ln2_g, ln2_b, w_fc, b_fc, w_fc2, b_fc2)

    x = jax.random.normal(keys[12], (B, T, C), dtype=jnp.float32)

    ref = block_reference(x, params)

    # Default path: batch split across available TensorCores (1 step on v5e/v6e).
    out = jax.block_until_ready(block_forward(x, params))
    assert out.shape == (B, T, C)
    assert jnp.allclose(out, ref, atol=5e-4, rtol=5e-4), "mismatch vs reference"

    # Explicit 2-step "parallel" batch axis (v7x-style split).
    out2 = jax.block_until_ready(block_forward(x, params, batch_per_step=1))
    assert jnp.allclose(out2, ref, atol=5e-4, rtol=5e-4), "mismatch (chunked)"

    # bf16 matmul operands (production-size option); stats/residuals stay f32.
    out3 = jax.block_until_ready(block_forward(x, params, matmul_dtype=jnp.bfloat16))
    assert jnp.allclose(out3, ref, atol=2e-2, rtol=2e-2), "mismatch (bf16 matmuls)"

    # Exact softmax reciprocal (switchable, for training/backward comparisons).
    out4 = jax.block_until_ready(block_forward(x, params, approx_recip=False))
    assert jnp.allclose(out4, ref, atol=5e-4, rtol=5e-4), "mismatch (exact recip)"

    print("KERNEL_OK")
</pallas_src>

<mosaic_0001>
module attributes {stable_mosaic.version = 11 : i64} {
  func.func @block_kernel(%arg0: i32, %arg1: memref<2x8x32xf32, #tpu.memory_space<vmem>>, %arg2: memref<1x32xf32, #tpu.memory_space<vmem>>, %arg3: memref<1x32xf32, #tpu.memory_space<vmem>>, %arg4: memref<32x96xf32, #tpu.memory_space<vmem>>, %arg5: memref<1x96xf32, #tpu.memory_space<vmem>>, %arg6: memref<32x32xf32, #tpu.memory_space<vmem>>, %arg7: memref<1x32xf32, #tpu.memory_space<vmem>>, %arg8: memref<1x32xf32, #tpu.memory_space<vmem>>, %arg9: memref<1x32xf32, #tpu.memory_space<vmem>>, %arg10: memref<32x128xf32, #tpu.memory_space<vmem>>, %arg11: memref<1x128xf32, #tpu.memory_space<vmem>>, %arg12: memref<128x32xf32, #tpu.memory_space<vmem>>, %arg13: memref<1x32xf32, #tpu.memory_space<vmem>>, %arg14: memref<2x8x32xf32, #tpu.memory_space<vmem>>) attributes {dimension_semantics = [#tpu.dimension_semantics<parallel>], iteration_bounds = array<i64: 1>, scalar_prefetch = 0 : i64, scratch_operands = 0 : i64, tpu.core_type = #tpu.core_type<tc>, window_params = [{transform_indices = @transform_0, window_bounds = array<i64: 2, 8, 32>}, {pipeline_mode = #tpu.pipeline_mode<synchronous>, transform_indices = @transform_1, window_bounds = array<i64: 1, 32>}, {pipeline_mode = #tpu.pipeline_mode<synchronous>, transform_indices = @transform_2, window_bounds = array<i64: 1, 32>}, {pipeline_mode = #tpu.pipeline_mode<synchronous>, transform_indices = @transform_3, window_bounds = array<i64: 32, 96>}, {pipeline_mode = #tpu.pipeline_mode<synchronous>, transform_indices = @transform_4, window_bounds = array<i64: 1, 96>}, {pipeline_mode = #tpu.pipeline_mode<synchronous>, transform_indices = @transform_5, window_bounds = array<i64: 32, 32>}, {pipeline_mode = #tpu.pipeline_mode<synchronous>, transform_indices = @transform_6, window_bounds = array<i64: 1, 32>}, {pipeline_mode = #tpu.pipeline_mode<synchronous>, transform_indices = @transform_7, window_bounds = array<i64: 1, 32>}, {pipeline_mode = #tpu.pipeline_mode<synchronous>, transform_indices = @transform_8, window_bounds = array<i64: 1, 32>}, {pipeline_mode = #tpu.pipeline_mode<synchronous>, transform_indices = @transform_9, window_bounds = array<i64: 32, 128>}, {pipeline_mode = #tpu.pipeline_mode<synchronous>, transform_indices = @transform_10, window_bounds = array<i64: 1, 128>}, {pipeline_mode = #tpu.pipeline_mode<synchronous>, transform_indices = @transform_11, window_bounds = array<i64: 128, 32>}, {pipeline_mode = #tpu.pipeline_mode<synchronous>, transform_indices = @transform_12, window_bounds = array<i64: 1, 32>}, {transform_indices = @transform_13, window_bounds = array<i64: 2, 8, 32>}]} {
    %c0 = arith.constant 0 : index
    %c0_0 = arith.constant 0 : index
    %c0_1 = arith.constant 0 : index
    %0 = vector.load %arg1[%c0, %c0_0, %c0_1] : memref<2x8x32xf32, #tpu.memory_space<vmem>>, vector<2x8x32xf32>
    %1 = vector.shape_cast %0 : vector<2x8x32xf32> to vector<16x32xf32>
    %c0_2 = arith.constant 0 : index
    %c0_3 = arith.constant 0 : index
    %2 = vector.load %arg2[%c0_2, %c0_3] : memref<1x32xf32, #tpu.memory_space<vmem>>, vector<1x32xf32>
    %c0_4 = arith.constant 0 : index
    %c0_5 = arith.constant 0 : index
    %3 = vector.load %arg3[%c0_4, %c0_5] : memref<1x32xf32, #tpu.memory_space<vmem>>, vector<1x32xf32>
    %cst = arith.constant dense<0.000000e+00> : vector<16xf32>
    %4 = vector.multi_reduction <add>, %1, %cst [1] : vector<16x32xf32> to vector<16xf32>
    %5 = vector.shape_cast %4 : vector<16xf32> to vector<16x1xf32>
    %cst_6 = arith.constant 3.200000e+01 : f32
    %6 = vector.broadcast %cst_6 : f32 to vector<16x1xf32>
    %7 = arith.divf %5, %6 : vector<16x1xf32>
    %8 = vector.broadcast %7 : vector<16x1xf32> to vector<16x32xf32>
    %9 = arith.subf %1, %8 : vector<16x32xf32>
    %10 = arith.mulf %9, %9 : vector<16x32xf32>
    %cst_7 = arith.constant dense<0.000000e+00> : vector<16xf32>
    %11 = vector.multi_reduction <add>, %10, %cst_7 [1] : vector<16x32xf32> to vector<16xf32>
    %12 = vector.shape_cast %11 : vector<16xf32> to vector<16x1xf32>
    %cst_8 = arith.constant 3.200000e+01 : f32
    %13 = vector.broadcast %cst_8 : f32 to vector<16x1xf32>
    %14 = arith.divf %12, %13 : vector<16x1xf32>
    %15 = vector.broadcast %7 : vector<16x1xf32> to vector<16x32xf32>
    %16 = arith.subf %1, %15 : vector<16x32xf32>
    %cst_9 = arith.constant 9.99999974E-6 : f32
    %17 = vector.broadcast %cst_9 : f32 to vector<16x1xf32>
    %18 = arith.addf %14, %17 : vector<16x1xf32>
    %19 = math.rsqrt %18 : vector<16x1xf32>
    %20 = vector.broadcast %19 : vector<16x1xf32> to vector<16x32xf32>
    %21 = arith.mulf %16, %20 : vector<16x32xf32>
    %22 = vector.broadcast %2 : vector<1x32xf32> to vector<16x32xf32>
    %23 = arith.mulf %21, %22 : vector<16x32xf32>
    %24 = vector.broadcast %3 : vector<1x32xf32> to vector<16x32xf32>
    %25 = arith.addf %23, %24 : vector<16x32xf32>
    %c0_10 = arith.constant 0 : index
    %c0_11 = arith.constant 0 : index
    %26 = vector.load %arg4[%c0_10, %c0_11] : memref<32x96xf32, #tpu.memory_space<vmem>>, vector<32x96xf32>
    %cst_12 = arith.constant dense<0.000000e+00> : vector<16x96xf32>
    %27 = tpu.matmul %25, %26, %cst_12 {dimension_numbers = #tpu.dot_dimension_numbers<[1], [0], [0], [1], [0, 0, 1, 1], [], []>} : vector<16x32xf32>, vector<32x96xf32>, vector<16x96xf32> -> vector<16x96xf32>
    %c0_13 = arith.constant 0 : index
    %c0_14 = arith.constant 0 : index
    %28 = vector.load %arg5[%c0_13, %c0_14] : memref<1x96xf32, #tpu.memory_space<vmem>>, vector<1x96xf32>
    %29 = vector.broadcast %28 : vector<1x96xf32> to vector<16x96xf32>
    %30 = arith.addf %27, %29 : vector<16x96xf32>
    %31 = vector.extract_strided_slice %30 {offsets = [0, 0], sizes = [16, 8], strides = [1, 1]} : vector<16x96xf32> to vector<16x8xf32>
    %32 = vector.shape_cast %31 : vector<16x8xf32> to vector<2x1x8x8xf32>
    %33 = vector.extract_strided_slice %30 {offsets = [0, 8], sizes = [16, 8], strides = [1, 1]} : vector<16x96xf32> to vector<16x8xf32>
    %34 = vector.shape_cast %33 : vector<16x8xf32> to vector<2x1x8x8xf32>
    %35 = vector.extract_strided_slice %30 {offsets = [0, 16], sizes = [16, 8], strides = [1, 1]} : vector<16x96xf32> to vector<16x8xf32>
    %36 = vector.shape_cast %35 : vector<16x8xf32> to vector<2x1x8x8xf32>
    %37 = vector.extract_strided_slice %30 {offsets = [0, 24], sizes = [16, 8], strides = [1, 1]} : vector<16x96xf32> to vector<16x8xf32>
    %38 = vector.shape_cast %37 : vector<16x8xf32> to vector<2x1x8x8xf32>
    %39 = tpu.concatenate %32, %34, %36, %38 in 1 : vector<2x1x8x8xf32>, vector<2x1x8x8xf32>, vector<2x1x8x8xf32>, vector<2x1x8x8xf32> -> vector<2x4x8x8xf32>
    %40 = vector.shape_cast %39 : vector<2x4x8x8xf32> to vector<8x8x8xf32>
    %cst_15 = arith.constant 0.353553385 : f32
    %41 = vector.broadcast %cst_15 : f32 to vector<8x8x8xf32>
    %42 = arith.mulf %40, %41 : vector<8x8x8xf32>
    %43 = vector.extract_strided_slice %30 {offsets = [0, 32], sizes = [16, 8], strides = [1, 1]} : vector<16x96xf32> to vector<16x8xf32>
    %44 = vector.shape_cast %43 : vector<16x8xf32> to vector<2x1x8x8xf32>
    %45 = vector.extract_strided_slice %30 {offsets = [0, 40], sizes = [16, 8], strides = [1, 1]} : vector<16x96xf32> to vector<16x8xf32>
    %46 = vector.shape_cast %45 : vector<16x8xf32> to vector<2x1x8x8xf32>
    %47 = vector.extract_strided_slice %30 {offsets = [0, 48], sizes = [16, 8], strides = [1, 1]} : vector<16x96xf32> to vector<16x8xf32>
    %48 = vector.shape_cast %47 : vector<16x8xf32> to vector<2x1x8x8xf32>
    %49 = vector.extract_strided_slice %30 {offsets = [0, 56], sizes = [16, 8], strides = [1, 1]} : vector<16x96xf32> to vector<16x8xf32>
    %50 = vector.shape_cast %49 : vector<16x8xf32> to vector<2x1x8x8xf32>
    %51 = tpu.concatenate %44, %46, %48, %50 in 1 : vector<2x1x8x8xf32>, vector<2x1x8x8xf32>, vector<2x1x8x8xf32>, vector<2x1x8x8xf32> -> vector<2x4x8x8xf32>
    %52 = vector.shape_cast %51 : vector<2x4x8x8xf32> to vector<8x8x8xf32>
    %53 = vector.extract_strided_slice %30 {offsets = [0, 64], sizes = [16, 8], strides = [1, 1]} : vector<16x96xf32> to vector<16x8xf32>
    %54 = vector.shape_cast %53 : vector<16x8xf32> to vector<2x1x8x8xf32>
    %55 = vector.extract_strided_slice %30 {offsets = [0, 72], sizes = [16, 8], strides = [1, 1]} : vector<16x96xf32> to vector<16x8xf32>
    %56 = vector.shape_cast %55 : vector<16x8xf32> to vector<2x1x8x8xf32>
    %57 = vector.extract_strided_slice %30 {offsets = [0, 80], sizes = [16, 8], strides = [1, 1]} : vector<16x96xf32> to vector<16x8xf32>
    %58 = vector.shape_cast %57 : vector<16x8xf32> to vector<2x1x8x8xf32>
    %59 = vector.extract_strided_slice %30 {offsets = [0, 88], sizes = [16, 8], strides = [1, 1]} : vector<16x96xf32> to vector<16x8xf32>
    %60 = vector.shape_cast %59 : vector<16x8xf32> to vector<2x1x8x8xf32>
    %61 = tpu.concatenate %54, %56, %58, %60 in 1 : vector<2x1x8x8xf32>, vector<2x1x8x8xf32>, vector<2x1x8x8xf32>, vector<2x1x8x8xf32> -> vector<2x4x8x8xf32>
    %62 = vector.shape_cast %61 : vector<2x4x8x8xf32> to vector<8x8x8xf32>
    %63 = tpu.iota {dimensions = array<i32: 0>} : vector<8x8xi32>
    %64 = tpu.iota {dimensions = array<i32: 1>} : vector<8x8xi32>
    %65 = arith.cmpi sle, %64, %63 : vector<8x8xi32>
    %66 = vector.shape_cast %65 : vector<8x8xi1> to vector<1x8x8xi1>
    "tpu.trace_start"() <{level = 10 : i32, message = "gqd,gkd->gqk"}> : () -> ()
    %cst_16 = arith.constant dense<0.000000e+00> : vector<8x8x8xf32>
    %67 = tpu.matmul %42, %52, %cst_16 {dimension_numbers = #tpu.dot_dimension_numbers<[2], [2], [1], [1], [0, 0, 0, 1, 1, 1], [0], [0]>} : vector<8x8x8xf32>, vector<8x8x8xf32>, vector<8x8x8xf32> -> vector<8x8x8xf32>
    %cst_17 = arith.constant -1.000000e+30 : f32
    "tpu.trace_stop"() : () -> ()
    %68 = vector.shape_cast %66 : vector<1x8x8xi1> to vector<1x8x8xi1>
    %69 = vector.broadcast %68 : vector<1x8x8xi1> to vector<8x8x8xi1>
    %70 = vector.broadcast %cst_17 : f32 to vector<8x8x8xf32>
    %71 = arith.select %69, %67, %70 : vector<8x8x8xi1>, vector<8x8x8xf32>
    %cst_18 = arith.constant dense<0xFF800000> : vector<8x8xf32>
    %72 = vector.multi_reduction <maximumf>, %71, %cst_18 [2] : vector<8x8x8xf32> to vector<8x8xf32>
    %73 = vector.shape_cast %72 : vector<8x8xf32> to vector<8x8x1xf32>
    %74 = vector.broadcast %73 : vector<8x8x1xf32> to vector<8x8x8xf32>
    %75 = arith.subf %71, %74 : vector<8x8x8xf32>
    %76 = math.exp %75 : vector<8x8x8xf32>
    %cst_19 = arith.constant dense<0.000000e+00> : vector<8x8xf32>
    %77 = vector.multi_reduction <add>, %76, %cst_19 [2] : vector<8x8x8xf32> to vector<8x8xf32>
    %78 = vector.shape_cast %77 : vector<8x8xf32> to vector<8x8x1xf32>
    %79 = tpu.reciprocal %78 {approx = true} : vector<8x8x1xf32> -> vector<8x8x1xf32>
    %80 = vector.broadcast %79 : vector<8x8x1xf32> to vector<8x8x8xf32>
    %81 = arith.mulf %76, %80 : vector<8x8x8xf32>
    "tpu.trace_start"() <{level = 10 : i32, message = "gqk,gkd->gqd"}> : () -> ()
    %cst_20 = arith.constant dense<0.000000e+00> : vector<8x8x8xf32>
    %82 = tpu.matmul %81, %62, %cst_20 {dimension_numbers = #tpu.dot_dimension_numbers<[2], [1], [1], [2], [0, 0, 0, 1, 1, 2], [0], [0]>} : vector<8x8x8xf32>, vector<8x8x8xf32>, vector<8x8x8xf32> -> vector<8x8x8xf32>
    "tpu.trace_stop"() : () -> ()
    %83 = vector.shape_cast %82 : vector<8x8x8xf32> to vector<2x4x8x8xf32>
    %84 = vector.extract_strided_slice %83 {offsets = [0, 0, 0, 0], sizes = [2, 1, 8, 8], strides = [1, 1, 1, 1]} : vector<2x4x8x8xf32> to vector<2x1x8x8xf32>
    %85 = vector.shape_cast %84 : vector<2x1x8x8xf32> to vector<2x8x8xf32>
    %86 = vector.extract_strided_slice %83 {offsets = [0, 1, 0, 0], sizes = [2, 1, 8, 8], strides = [1, 1, 1, 1]} : vector<2x4x8x8xf32> to vector<2x1x8x8xf32>
    %87 = vector.shape_cast %86 : vector<2x1x8x8xf32> to vector<2x8x8xf32>
    %88 = vector.extract_strided_slice %83 {offsets = [0, 2, 0, 0], sizes = [2, 1, 8, 8], strides = [1, 1, 1, 1]} : vector<2x4x8x8xf32> to vector<2x1x8x8xf32>
    %89 = vector.shape_cast %88 : vector<2x1x8x8xf32> to vector<2x8x8xf32>
    %90 = vector.extract_strided_slice %83 {offsets = [0, 3, 0, 0], sizes = [2, 1, 8, 8], strides = [1, 1, 1, 1]} : vector<2x4x8x8xf32> to vector<2x1x8x8xf32>
    %91 = vector.shape_cast %90 : vector<2x1x8x8xf32> to vector<2x8x8xf32>
    %92 = tpu.concatenate %85, %87, %89, %91 in 2 : vector<2x8x8xf32>, vector<2x8x8xf32>, vector<2x8x8xf32>, vector<2x8x8xf32> -> vector<2x8x32xf32>
    %93 = vector.shape_cast %92 : vector<2x8x32xf32> to vector<16x32xf32>
    %c0_21 = arith.constant 0 : index
    %c0_22 = arith.constant 0 : index
    %94 = vector.load %arg6[%c0_21, %c0_22] : memref<32x32xf32, #tpu.memory_space<vmem>>, vector<32x32xf32>
    %cst_23 = arith.constant dense<0.000000e+00> : vector<16x32xf32>
    %95 = tpu.matmul %93, %94, %cst_23 {dimension_numbers = #tpu.dot_dimension_numbers<[1], [0], [0], [1], [0, 0, 1, 1], [], []>} : vector<16x32xf32>, vector<32x32xf32>, vector<16x32xf32> -> vector<16x32xf32>
    %c0_24 = arith.constant 0 : index
    %c0_25 = arith.constant 0 : index
    %96 = vector.load %arg7[%c0_24, %c0_25] : memref<1x32xf32, #tpu.memory_space<vmem>>, vector<1x32xf32>
    %97 = vector.broadcast %96 : vector<1x32xf32> to vector<16x32xf32>
    %98 = arith.addf %95, %97 : vector<16x32xf32>
    %99 = arith.addf %1, %98 : vector<16x32xf32>
    %c0_26 = arith.constant 0 : index
    %c0_27 = arith.constant 0 : index
    %100 = vector.load %arg8[%c0_26, %c0_27] : memref<1x32xf32, #tpu.memory_space<vmem>>, vector<1x32xf32>
    %c0_28 = arith.constant 0 : index
    %c0_29 = arith.constant 0 : index
    %101 = vector.load %arg9[%c0_28, %c0_29] : memref<1x32xf32, #tpu.memory_space<vmem>>, vector<1x32xf32>
    %cst_30 = arith.constant dense<0.000000e+00> : vector<16xf32>
    %102 = vector.multi_reduction <add>, %99, %cst_30 [1] : vector<16x32xf32> to vector<16xf32>
    %103 = vector.shape_cast %102 : vector<16xf32> to vector<16x1xf32>
    %cst_31 = arith.constant 3.200000e+01 : f32
    %104 = vector.broadcast %cst_31 : f32 to vector<16x1xf32>
    %105 = arith.divf %103, %104 : vector<16x1xf32>
    %106 = vector.broadcast %105 : vector<16x1xf32> to vector<16x32xf32>
    %107 = arith.subf %99, %106 : vector<16x32xf32>
    %108 = arith.mulf %107, %107 : vector<16x32xf32>
    %cst_32 = arith.constant dense<0.000000e+00> : vector<16xf32>
    %109 = vector.multi_reduction <add>, %108, %cst_32 [1] : vector<16x32xf32> to vector<16xf32>
    %110 = vector.shape_cast %109 : vector<16xf32> to vector<16x1xf32>
    %cst_33 = arith.constant 3.200000e+01 : f32
    %111 = vector.broadcast %cst_33 : f32 to vector<16x1xf32>
    %112 = arith.divf %110, %111 : vector<16x1xf32>
    %113 = vector.broadcast %105 : vector<16x1xf32> to vector<16x32xf32>
    %114 = arith.subf %99, %113 : vector<16x32xf32>
    %cst_34 = arith.constant 9.99999974E-6 : f32
    %115 = vector.broadcast %cst_34 : f32 to vector<16x1xf32>
    %116 = arith.addf %112, %115 : vector<16x1xf32>
    %117 = math.rsqrt %116 : vector<16x1xf32>
    %118 = vector.broadcast %117 : vector<16x1xf32> to vector<16x32xf32>
    %119 = arith.mulf %114, %118 : vector<16x32xf32>
    %120 = vector.broadcast %100 : vector<1x32xf32> to vector<16x32xf32>
    %121 = arith.mulf %119, %120 : vector<16x32xf32>
    %122 = vector.broadcast %101 : vector<1x32xf32> to vector<16x32xf32>
    %123 = arith.addf %121, %122 : vector<16x32xf32>
    %c0_35 = arith.constant 0 : index
    %c0_36 = arith.constant 0 : index
    %124 = vector.load %arg10[%c0_35, %c0_36] : memref<32x128xf32, #tpu.memory_space<vmem>>, vector<32x128xf32>
    %cst_37 = arith.constant dense<0.000000e+00> : vector<16x128xf32>
    %125 = tpu.matmul %123, %124, %cst_37 {dimension_numbers = #tpu.dot_dimension_numbers<[1], [0], [0], [1], [0, 0, 1, 1], [], []>} : vector<16x32xf32>, vector<32x128xf32>, vector<16x128xf32> -> vector<16x128xf32>
    %c0_38 = arith.constant 0 : index
    %c0_39 = arith.constant 0 : index
    %126 = vector.load %arg11[%c0_38, %c0_39] : memref<1x128xf32, #tpu.memory_space<vmem>>, vector<1x128xf32>
    %127 = vector.broadcast %126 : vector<1x128xf32> to vector<16x128xf32>
    %128 = arith.addf %125, %127 : vector<16x128xf32>
    %cst_40 = arith.constant 5.000000e-01 : f32
    %129 = vector.broadcast %cst_40 : f32 to vector<16x128xf32>
    %130 = arith.mulf %129, %128 : vector<16x128xf32>
    %cst_41 = arith.constant 4.471500e-02 : f32
    %131 = vector.broadcast %cst_41 : f32 to vector<16x128xf32>
    %132 = arith.mulf %131, %128 : vector<16x128xf32>
    %133 = arith.mulf %132, %128 : vector<16x128xf32>
    %134 = arith.mulf %133, %128 : vector<16x128xf32>
    %135 = arith.addf %128, %134 : vector<16x128xf32>
    %cst_42 = arith.constant 0.797884583 : f32
    %136 = vector.broadcast %cst_42 : f32 to vector<16x128xf32>
    %137 = arith.mulf %136, %135 : vector<16x128xf32>
    %138 = math.tanh %137 : vector<16x128xf32>
    %cst_43 = arith.constant 1.000000e+00 : f32
    %139 = vector.broadcast %cst_43 : f32 to vector<16x128xf32>
    %140 = arith.addf %139, %138 : vector<16x128xf32>
    %141 = arith.mulf %130, %140 : vector<16x128xf32>
    %c0_44 = arith.constant 0 : index
    %c0_45 = arith.constant 0 : index
    %142 = vector.load %arg12[%c0_44, %c0_45] : memref<128x32xf32, #tpu.memory_space<vmem>>, vector<128x32xf32>
    %cst_46 = arith.constant dense<0.000000e+00> : vector<16x32xf32>
    %143 = tpu.matmul %141, %142, %cst_46 {dimension_numbers = #tpu.dot_dimension_numbers<[1], [0], [0], [1], [0, 0, 1, 1], [], []>} : vector<16x128xf32>, vector<128x32xf32>, vector<16x32xf32> -> vector<16x32xf32>
    %c0_47 = arith.constant 0 : index
    %c0_48 = arith.constant 0 : index
    %144 = vector.load %arg13[%c0_47, %c0_48] : memref<1x32xf32, #tpu.memory_space<vmem>>, vector<1x32xf32>
    %145 = vector.broadcast %144 : vector<1x32xf32> to vector<16x32xf32>
    %146 = arith.addf %143, %145 : vector<16x32xf32>
    %147 = arith.addf %99, %146 : vector<16x32xf32>
    %148 = vector.shape_cast %147 : vector<16x32xf32> to vector<2x8x32xf32>
    %c0_49 = arith.constant 0 : index
    %c0_50 = arith.constant 0 : index
    %c0_51 = arith.constant 0 : index
    %149 = vector.load %arg14[%c0_49, %c0_50, %c0_51] : memref<2x8x32xf32, #tpu.memory_space<vmem>>, vector<2x8x32xf32>
    tpu.vector_store %arg14[%c0_49, %c0_50, %c0_51], %148 {strides = array<i32>} : memref<2x8x32xf32, #tpu.memory_space<vmem>>, vector<2x8x32xf32>,
    return
  }
  func.func @transform_0(%arg0: i32) -> (i32, i32, i32) {
    %c0_i32 = arith.constant 0 : i32
    %c0_i32_0 = arith.constant 0 : i32
    %c0_i32_1 = arith.constant 0 : i32
    return %arg0, %c0_i32, %c0_i32_0 : i32, i32, i32
  }
  func.func @transform_1(%arg0: i32) -> (i32, i32) {
    %c0_i32 = arith.constant 0 : i32
    %c0_i32_0 = arith.constant 0 : i32
    %c0_i32_1 = arith.constant 0 : i32
    return %c0_i32, %c0_i32_0 : i32, i32
  }
  func.func @transform_2(%arg0: i32) -> (i32, i32) {
    %c0_i32 = arith.constant 0 : i32
    %c0_i32_0 = arith.constant 0 : i32
    %c0_i32_1 = arith.constant 0 : i32
    return %c0_i32, %c0_i32_0 : i32, i32
  }
  func.func @transform_3(%arg0: i32) -> (i32, i32) {
    %c0_i32 = arith.constant 0 : i32
    %c0_i32_0 = arith.constant 0 : i32
    %c0_i32_1 = arith.constant 0 : i32
    return %c0_i32, %c0_i32_0 : i32, i32
  }
  func.func @transform_4(%arg0: i32) -> (i32, i32) {
    %c0_i32 = arith.constant 0 : i32
    %c0_i32_0 = arith.constant 0 : i32
    %c0_i32_1 = arith.constant 0 : i32
    return %c0_i32, %c0_i32_0 : i32, i32
  }
  func.func @transform_5(%arg0: i32) -> (i32, i32) {
    %c0_i32 = arith.constant 0 : i32
    %c0_i32_0 = arith.constant 0 : i32
    %c0_i32_1 = arith.constant 0 : i32
    return %c0_i32, %c0_i32_0 : i32, i32
  }
  func.func @transform_6(%arg0: i32) -> (i32, i32) {
    %c0_i32 = arith.constant 0 : i32
    %c0_i32_0 = arith.constant 0 : i32
    %c0_i32_1 = arith.constant 0 : i32
    return %c0_i32, %c0_i32_0 : i32, i32
  }
  func.func @transform_7(%arg0: i32) -> (i32, i32) {
    %c0_i32 = arith.constant 0 : i32
    %c0_i32_0 = arith.constant 0 : i32
    %c0_i32_1 = arith.constant 0 : i32
    return %c0_i32, %c0_i32_0 : i32, i32
  }
  func.func @transform_8(%arg0: i32) -> (i32, i32) {
    %c0_i32 = arith.constant 0 : i32
    %c0_i32_0 = arith.constant 0 : i32
    %c0_i32_1 = arith.constant 0 : i32
    return %c0_i32, %c0_i32_0 : i32, i32
  }
  func.func @transform_9(%arg0: i32) -> (i32, i32) {
    %c0_i32 = arith.constant 0 : i32
    %c0_i32_0 = arith.constant 0 : i32
    %c0_i32_1 = arith.constant 0 : i32
    return %c0_i32, %c0_i32_0 : i32, i32
  }
  func.func @transform_10(%arg0: i32) -> (i32, i32) {
    %c0_i32 = arith.constant 0 : i32
    %c0_i32_0 = arith.constant 0 : i32
    %c0_i32_1 = arith.constant 0 : i32
    return %c0_i32, %c0_i32_0 : i32, i32
  }
  func.func @transform_11(%arg0: i32) -> (i32, i32) {
    %c0_i32 = arith.constant 0 : i32
    %c0_i32_0 = arith.constant 0 : i32
    %c0_i32_1 = arith.constant 0 : i32
    return %c0_i32, %c0_i32_0 : i32, i32
  }
  func.func @transform_12(%arg0: i32) -> (i32, i32) {
    %c0_i32 = arith.constant 0 : i32
    %c0_i32_0 = arith.constant 0 : i32
    %c0_i32_1 = arith.constant 0 : i32
    return %c0_i32, %c0_i32_0 : i32, i32
  }
  func.func @transform_13(%arg0: i32) -> (i32, i32, i32) {
    %c0_i32 = arith.constant 0 : i32
    %c0_i32_0 = arith.constant 0 : i32
    %c0_i32_1 = arith.constant 0 : i32
    return %arg0, %c0_i32, %c0_i32_0 : i32, i32, i32
  }
}

</mosaic_0001>

<llo_original>
// kernel: tpu_custom_call.1
$region0: #{tpu_custom_call.1}
  #allocation0 [shape = 'u32[]', space=smem, size = 0x4, offset = 0x4, fixed_abs, tag = 'smem constant byte address 0x4 - core index']
  #allocation1 [shape = 'u32[144,128]{1,0:T(1,128)}', space=vmem, size = 0x12000, scoped, tag = 'internal scratch']
  %s0 = inlined_call_operand.vmem [shape: f32[2,8,32], index: 0, kind: input, shape index: {}]
  %s1 = inlined_call_operand.vmem [shape: f32[1,32], index: 1, kind: input, shape index: {}]
  %s2 = inlined_call_operand.vmem [shape: f32[1,32], index: 2, kind: input, shape index: {}]
  %s3 = inlined_call_operand.vmem [shape: f32[32,96], index: 3, kind: input, shape index: {}]
  %s4 = inlined_call_operand.vmem [shape: f32[1,96], index: 4, kind: input, shape index: {}]
  %s5 = inlined_call_operand.vmem [shape: f32[32,32], index: 5, kind: input, shape index: {}]
  %s6 = inlined_call_operand.vmem [shape: f32[1,32], index: 6, kind: input, shape index: {}]
  %s7 = inlined_call_operand.vmem [shape: f32[1,32], index: 7, kind: input, shape index: {}]
  %s8 = inlined_call_operand.vmem [shape: f32[1,32], index: 8, kind: input, shape index: {}]
  %s9 = inlined_call_operand.vmem [shape: f32[32,128], index: 9, kind: input, shape index: {}]
  %s10 = inlined_call_operand.vmem [shape: f32[1,128], index: 10, kind: input, shape index: {}]
  %s11 = inlined_call_operand.vmem [shape: f32[128,32], index: 11, kind: input, shape index: {}]
  %s12 = inlined_call_operand.vmem [shape: f32[1,32], index: 12, kind: input, shape index: {}]
  %s13 = inlined_call_operand.hbm [shape: f32[2,8,32], index: 13, kind: output, shape index: {}]
  %s14 = sld [smem:[#allocation0]]
  $region62: #{tpu_custom_call.1} parent=0
    _
  %s16 = ssub.s32 1, %s14
  %s17 = scalar_select 0, %s16, %s14
  $region1: #{tpu_custom_call.1} parent=0
    #allocation2 [shape = 'u8[8192]{0}', space=vmem, size = 0x2000, scoped, tag = 'output window, operand 0, single buffered']
    #allocation3 [shape = 's32[1]{0}', space=sflag, size = 0x4, scoped, tag = 'scoped memory for tpu_custom_call.1']
    %18 = vsyncpa [#allocation3], 0
    // Predicated region
    $region2: #{tpu_custom_call.1} parent=1 // pred_check
      _
    $region3: #{tpu_custom_call.1} parent=1 // pred_check_branch
      %20 = sbr.rel (0) target = $region5
    $region4: #{tpu_custom_call.1} parent=1 // pred_region
      _
    $region5: #{tpu_custom_call.1} parent=1 // pred_fallthru
      _
    // Predicated region
    $region6: #{tpu_custom_call.1} parent=1 // pred_check
      _
    $region7: #{tpu_custom_call.1} parent=1 // pred_check_branch
      %22 = sbr.rel (0) target = $region9
    $region8: #{tpu_custom_call.1} parent=1 // pred_region
      _
    $region9: #{tpu_custom_call.1} parent=1 // pred_fallthru
      _
    // Predicated region
    $region10: #{tpu_custom_call.1} parent=1 // pred_check
      _
    $region11: #{tpu_custom_call.1} parent=1 // pred_check_branch
      %24 = sbr.rel (0) target = $region13
    $region12: #{tpu_custom_call.1} parent=1 // pred_region
      _
    $region13: #{tpu_custom_call.1} parent=1 // pred_fallthru
      _
    // Predicated region
    $region14: #{tpu_custom_call.1} parent=1 // pred_check
      _
    $region15: #{tpu_custom_call.1} parent=1 // pred_check_branch
      %26 = sbr.rel (0) target = $region17
    $region16: #{tpu_custom_call.1} parent=1 // pred_region
      _
    $region17: #{tpu_custom_call.1} parent=1 // pred_fallthru
      _
    // Predicated region
    $region18: #{tpu_custom_call.1} parent=1 // pred_check
      _
    $region19: #{tpu_custom_call.1} parent=1 // pred_check_branch
      %28 = sbr.rel (0) target = $region21
    $region20: #{tpu_custom_call.1} parent=1 // pred_region
      _
    $region21: #{tpu_custom_call.1} parent=1 // pred_fallthru
      _
    // Predicated region
    $region22: #{tpu_custom_call.1} parent=1 // pred_check
      _
    $region23: #{tpu_custom_call.1} parent=1 // pred_check_branch
      %30 = sbr.rel (0) target = $region25
    $region24: #{tpu_custom_call.1} parent=1 // pred_region
      _
    $region25: #{tpu_custom_call.1} parent=1 // pred_fallthru
      _
    // Predicated region
    $region26: #{tpu_custom_call.1} parent=1 // pred_check
      _
    $region27: #{tpu_custom_call.1} parent=1 // pred_check_branch
      %32 = sbr.rel (0) target = $region29
    $region28: #{tpu_custom_call.1} parent=1 // pred_region
      _
    $region29: #{tpu_custom_call.1} parent=1 // pred_fallthru
      _
    // Predicated region
    $region30: #{tpu_custom_call.1} parent=1 // pred_check
      _
    $region31: #{tpu_custom_call.1} parent=1 // pred_check_branch
      %34 = sbr.rel (0) target = $region33
    $region32: #{tpu_custom_call.1} parent=1 // pred_region
      _
    $region33: #{tpu_custom_call.1} parent=1 // pred_fallthru
      _
    // Predicated region
    $region34: #{tpu_custom_call.1} parent=1 // pred_check
      _
    $region35: #{tpu_custom_call.1} parent=1 // pred_check_branch
      %36 = sbr.rel (0) target = $region37
    $region36: #{tpu_custom_call.1} parent=1 // pred_region
      _
    $region37: #{tpu_custom_call.1} parent=1 // pred_fallthru
      _
    // Predicated region
    $region38: #{tpu_custom_call.1} parent=1 // pred_check
      _
    $region39: #{tpu_custom_call.1} parent=1 // pred_check_branch
      %38 = sbr.rel (0) target = $region41
    $region40: #{tpu_custom_call.1} parent=1 // pred_region
      _
    $region41: #{tpu_custom_call.1} parent=1 // pred_fallthru
      _
    // Predicated region
    $region42: #{tpu_custom_call.1} parent=1 // pred_check
      _
    $region43: #{tpu_custom_call.1} parent=1 // pred_check_branch
      %40 = sbr.rel (0) target = $region45
    $region44: #{tpu_custom_call.1} parent=1 // pred_region
      _
    $region45: #{tpu_custom_call.1} parent=1 // pred_fallthru
      _
    // Predicated region
    $region46: #{tpu_custom_call.1} parent=1 // pred_check
      _
    $region47: #{tpu_custom_call.1} parent=1 // pred_check_branch
      %42 = sbr.rel (0) target = $region49
    $region48: #{tpu_custom_call.1} parent=1 // pred_region
      _
    $region49: #{tpu_custom_call.1} parent=1 // pred_fallthru
      _
    // Predicated region
    $region50: #{tpu_custom_call.1} parent=1 // pred_check
      _
    $region51: #{tpu_custom_call.1} parent=1 // pred_check_branch
      %44 = sbr.rel (0) target = $region53
    $region52: #{tpu_custom_call.1} parent=1 // pred_region
      _
    $region53: #{tpu_custom_call.1} parent=1 // pred_fallthru
      _
    %v45 = vld [vmem:[%s0] sm:$0xff]
    %v46 = vld [vmem:[%s0 + $0x8] sm:$0xff]
    %v47 = vld [vmem:[%s1] sm:$0x1]
    %v48 = vld [vmem:[%s2] sm:$0x1]
    %vm49 = vcmask 261120
    %v50 = vsel %vm49, %v45, 0.0
    %51 = vadd.xlane.f32.xlu0 %v50
    %v52 = vpop.xlane.xlu0 %51
    %v53 = vsel %vm49, %v46, 0.0
    %54 = vadd.xlane.f32.xlu0 %v53
    %v55 = vpop.xlane.xlu0 %54
    %v56 = vrcp.pop 32.0
    %v57 = vmul.f32 %v52, %v56
    %v58 = vmul.f32 %v55, %v56
    %v59 = vsub.f32 %v45, %v57
    %v60 = vsub.f32 %v46, %v58
    %v61 = vmul.f32 %v59, %v59
    %v62 = vmul.f32 %v60, %v60
    %v63 = vsel %vm49, %v61, 0.0
    %64 = vadd.xlane.f32.xlu0 %v63
    %v65 = vpop.xlane.xlu0 %64
    %v66 = vsel %vm49, %v62, 0.0
    %67 = vadd.xlane.f32.xlu0 %v66
    %v68 = vpop.xlane.xlu0 %67
    %v69 = vmul.f32 %v65, %v56
    %v70 = vmul.f32 %v68, %v56
    %v71 = vadd.f32 %v69, 1e-05
    %v72 = vadd.f32 %v70, 1e-05
    %v73 = vrsqrt.pop %v71
    %v74 = vrsqrt.pop %v72
    %v75 = vmul.f32 %v59, %v73
    %v76 = vmul.f32 %v60, %v74
    %v78 = vlaneseq
    %v79 = vshrl.u32 %v78, 7
    %v80 = vsub.s32 0, %v79
    %v81 = vrot.slane %v47, %v80
    %v83 = vmul.f32 %v75, %v81
    %v84 = vmul.f32 %v76, %v81
    %v86 = vlaneseq
    %v87 = vshrl.u32 %v86, 7
    %v88 = vsub.s32 0, %v87
    %v89 = vrot.slane %v48, %v88
    %v91 = vadd.f32 %v83, %v89
    %v92 = vadd.f32 %v84, %v89
    %v93 = vld [vmem:[%s3] sm:$0xff]
    %v94 = vld [vmem:[%s3 + $0x8] sm:$0xff]
    %v95 = vld [vmem:[%s3 + $0x10] sm:$0xff]
    %v96 = vld [vmem:[%s3 + $0x18] sm:$0xff]
    %v97 = vld [vmem:[%s4] sm:$0x1]
    %v99 = vlaneseq
    %v100 = vshrl.u32 %v99, 7
    %v101 = vsub.s32 0, %v100
    %v102 = vrot.slane %v97, %v101
    %v105 = vsel %vm49, %v91, 0
    %v108 = vsel %vm49, %v92, 0
    %110 = vmatprep.subr.mxu0 0.0
    %111 = vmatpush1.msra.mxu0 %v93
    %112 = vmatprep.subr.mxu0 0.0
    %113 = vmatpush1.msra.mxu0 %v94
    %114 = vmatprep.subr.mxu0 0.0
    %115 = vmatpush1.msra.mxu0 %v95
    %116 = vmatprep.subr.mxu0 0.0
    %117 = vmatpush1.msra.mxu0 %v96
    %118 = vmatprep.subr.mxu0 0.0
    %119 = vmatpush1.msra.mxu0 0.0
    %120 = vmatprep.subr.mxu0 0.0
    %121 = vmatpush1.msra.mxu0 0.0
    %122 = vmatprep.subr.mxu0 0.0
    %123 = vmatpush1.msra.mxu0 0.0
    %124 = vmatprep.subr.mxu0 0.0
    %125 = vmatpush1.msra.mxu0 0.0
    %126 = vmatprep.subr.mxu0 0.0
    %127 = vmatpush1.msra.mxu0 0.0
    %128 = vmatprep.subr.mxu0 0.0
    %129 = vmatpush1.msra.mxu0 0.0
    %130 = vmatprep.subr.mxu0 0.0
    %131 = vmatpush1.msra.mxu0 0.0
    %132 = vmatprep.subr.mxu0 0.0
    %133 = vmatpush1.msra.mxu0 0.0
    %134 = vmatprep.subr.mxu0 0.0
    %135 = vmatpush1.msra.mxu0 0.0
    %136 = vmatprep.subr.mxu0 0.0
    %137 = vmatpush1.msra.mxu0 0.0
    %138 = vmatprep.subr.mxu0 0.0
    %139 = vmatpush1.msra.mxu0 0.0
    %140 = vmatprep.subr.mxu0 0.0
    %141 = vmatpush1.msra.mxu0 0.0
    %142 = vmatprep.subr.mxu0 0.0
    %143 = vmatpush1.msra.mxu0 0.0
    %144 = vmatprep.subr.mxu0 0.0
    %145 = vmatpush1.msra.mxu0 0.0
    %146 = vmatprep.subr.mxu0 0.0
    %147 = vmatpush1.msra.mxu0 0.0
    %148 = vmatprep.subr.mxu0 0.0
    %149 = vmatpush1.msra.mxu0 0.0
    %150 = vmatprep.subr.mxu0 0.0
    %151 = vmatpush1.msra.mxu0 0.0
    %152 = vmatprep.subr.mxu0 0.0
    %153 = vmatpush1.msra.mxu0 0.0
    %154 = vmatprep.subr.mxu0 0.0
    %155 = vmatpush1.msra.mxu0 0.0
    %156 = vmatprep.subr.mxu0 0.0
    %157 = vmatpush1.msra.mxu0 0.0
    %158 = vmatprep.subr.mxu0 0.0
    %159 = vmatpush1.msra.mxu0 0.0
    %160 = vmatprep.subr.mxu0 0.0
    %161 = vmatpush1.msra.mxu0 0.0
    %162 = vmatprep.subr.mxu0 0.0
    %163 = vmatpush1.msra.mxu0 0.0
    %164 = vmatprep.subr.mxu0 0.0
    %165 = vmatpush1.msra.mxu0 0.0
    %166 = vmatprep.subr.mxu0 0.0
    %167 = vmatpush1.msra.mxu0 0.0
    %168 = vmatprep.subr.mxu0 0.0
    %169 = vmatpush1.msra.mxu0 0.0
    %170 = vmatprep.subr.mxu0 0.0
    %171 = vmatpush1.msra.mxu0 0.0
    %172 = vmatprep.subr.mxu0 0.0
    %173 = vmatpush1.msra.mxu0 0.0
    %174 = vmatprep.mubr.f32.mxu0 0.0
    %175 = vmatmul.mubr.f32.gmra.mrb[0].mxu0 %v105
    %v176 = vpop.f32.mrb[0].mxu0
    %v177 = vadd.f32 %v102, %v176
    %v178 = vpop.f32.mrb[0].mxu0
    %179 = vmatprep.mubr.f32.mxu0 0.0
    %180 = vmatmul.mubr.f32.gmra.mrb[0].mxu0 %v108
    %v181 = vpop.f32.mrb[0].mxu0
    %v182 = vadd.f32 %v102, %v181
    %v183 = vpop.f32.mrb[0].mxu0
    %184 = vdwg.mxu0
    %187 = vrot.lane.b32.xlu0 %v177, 120
    %v188 = vpop.permute.xlu0 %187
    %189 = vrot.lane.b32.xlu0 %v182, 120
    %v190 = vpop.permute.xlu0 %189
    %193 = vrot.lane.b32.xlu0 %v177, 112
    %v194 = vpop.permute.xlu0 %193
    %195 = vrot.lane.b32.xlu0 %v182, 112
    %v196 = vpop.permute.xlu0 %195
    %199 = vrot.lane.b32.xlu0 %v177, 104
    %v200 = vpop.permute.xlu0 %199
    %201 = vrot.lane.b32.xlu0 %v182, 104
    %v202 = vpop.permute.xlu0 %201
    %v205 = vmul.f32 %v177, 0.35355338
    %v206 = vmul.f32 %v188, 0.35355338
    %v207 = vmul.f32 %v194, 0.35355338
    %v208 = vmul.f32 %v200, 0.35355338
    %v209 = vmul.f32 %v182, 0.35355338
    %v210 = vmul.f32 %v190, 0.35355338
    %v211 = vmul.f32 %v196, 0.35355338
    %v212 = vmul.f32 %v202, 0.35355338
    %v213 = vlaneseq
    %v214 = vshrl.u32 %v213, 7
    %v215 = vlaneseq
    %v216 = vand.u32 %v215, 127
    %vm217 = vcmp.le.s32.totalorder %v216, %v214
    %218 = vrot.lane.b32.xlu0 %v177, 96
    %v219 = vpop.permute.xlu0 %218
    %vm220 = vcmask 64512
    %v222 = vsel %vm220, %v205, 0
    %v224 = vsel %vm220, %v219, 0
    %226 = vmatprep.subr.mxu0 0.0
    %227 = vmatpush1.xpose.msra.mxu0 %v224
    %228 = vmatprep.subr.mxu0 0.0
    %229 = vmatpush1.xpose.msra.mxu0 0.0
    %230 = vmatprep.subr.mxu0 0.0
    %231 = vmatpush1.xpose.msra.mxu0 0.0
    %232 = vmatprep.subr.mxu0 0.0
    %233 = vmatpush1.xpose.msra.mxu0 0.0
    %234 = vmatprep.subr.mxu0 0.0
    %235 = vmatpush1.xpose.msra.mxu0 0.0
    %236 = vmatprep.subr.mxu0 0.0
    %237 = vmatpush1.xpose.msra.mxu0 0.0
    %238 = vmatprep.subr.mxu0 0.0
    %239 = vmatpush1.xpose.msra.mxu0 0.0
    %240 = vmatprep.subr.mxu0 0.0
    %241 = vmatpush1.xpose.msra.mxu0 0.0
    %242 = vmatprep.subr.mxu0 0.0
    %243 = vmatpush1.xpose.msra.mxu0 0.0
    %244 = vmatprep.subr.mxu0 0.0
    %245 = vmatpush1.xpose.msra.mxu0 0.0
    %246 = vmatprep.subr.mxu0 0.0
    %247 = vmatpush1.xpose.msra.mxu0 0.0
    %248 = vmatprep.subr.mxu0 0.0
    %249 = vmatpush1.xpose.msra.mxu0 0.0
    %250 = vmatprep.subr.mxu0 0.0
    %251 = vmatpush1.xpose.msra.mxu0 0.0
    %252 = vmatprep.subr.mxu0 0.0
    %253 = vmatpush1.xpose.msra.mxu0 0.0
    %254 = vmatprep.subr.mxu0 0.0
    %255 = vmatpush1.xpose.msra.mxu0 0.0
    %256 = vmatprep.subr.mxu0 0.0
    %257 = vmatpush1.xpose.msra.mxu0 0.0
    %258 = vmatprep.subr.mxu0 0.0
    %259 = vmatpush1.xpose.msra.mxu0 0.0
    %260 = vmatprep.subr.mxu0 0.0
    %261 = vmatpush1.xpose.msra.mxu0 0.0
    %262 = vmatprep.subr.mxu0 0.0
    %263 = vmatpush1.xpose.msra.mxu0 0.0
    %264 = vmatprep.subr.mxu0 0.0
    %265 = vmatpush1.xpose.msra.mxu0 0.0
    %266 = vmatprep.subr.mxu0 0.0
    %267 = vmatpush1.xpose.msra.mxu0 0.0
    %268 = vmatprep.subr.mxu0 0.0
    %269 = vmatpush1.xpose.msra.mxu0 0.0
    %270 = vmatprep.subr.mxu0 0.0
    %271 = vmatpush1.xpose.msra.mxu0 0.0
    %272 = vmatprep.subr.mxu0 0.0
    %273 = vmatpush1.xpose.msra.mxu0 0.0
    %274 = vmatprep.subr.mxu0 0.0
    %275 = vmatpush1.xpose.msra.mxu0 0.0
    %276 = vmatprep.subr.mxu0 0.0
    %277 = vmatpush1.xpose.msra.mxu0 0.0
    %278 = vmatprep.subr.mxu0 0.0
    %279 = vmatpush1.xpose.msra.mxu0 0.0
    %280 = vmatprep.subr.mxu0 0.0
    %281 = vmatpush1.xpose.msra.mxu0 0.0
    %282 = vmatprep.subr.mxu0 0.0
    %283 = vmatpush1.xpose.msra.mxu0 0.0
    %284 = vmatprep.subr.mxu0 0.0
    %285 = vmatpush1.xpose.msra.mxu0 0.0
    %286 = vmatprep.subr.mxu0 0.0
    %287 = vmatpush1.xpose.msra.mxu0 0.0
    %288 = vmatprep.subr.mxu0 0.0
    %289 = vmatpush1.xpose.msra.mxu0 0.0
    %290 = vmatprep.mubr.f32.mxu0 0.0
    %291 = vmatmul.mubr.f32.gmra.mrb[0].mxu0 %v222
    %v292 = vpop.f32.mrb[0].mxu0
    %v293 = vadd.f32 0.0, %v292
    %v294 = vpop.f32.mrb[0].mxu0
    %295 = vdwg.mxu0
    %296 = vrot.lane.b32.xlu0 %v188, 96
    %v297 = vpop.permute.xlu0 %296
    %v299 = vsel %vm220, %v206, 0
    %v301 = vsel %vm220, %v297, 0
    %303 = vmatprep.subr.mxu0 0.0
    %304 = vmatpush1.xpose.msra.mxu0 %v301
    %305 = vmatprep.subr.mxu0 0.0
    %306 = vmatpush1.xpose.msra.mxu0 0.0
    %307 = vmatprep.subr.mxu0 0.0
    %308 = vmatpush1.xpose.msra.mxu0 0.0
    %309 = vmatprep.subr.mxu0 0.0
    %310 = vmatpush1.xpose.msra.mxu0 0.0
    %311 = vmatprep.subr.mxu0 0.0
    %312 = vmatpush1.xpose.msra.mxu0 0.0
    %313 = vmatprep.subr.mxu0 0.0
    %314 = vmatpush1.xpose.msra.mxu0 0.0
    %315 = vmatprep.subr.mxu0 0.0
    %316 = vmatpush1.xpose.msra.mxu0 0.0
    %317 = vmatprep.subr.mxu0 0.0
    %318 = vmatpush1.xpose.msra.mxu0 0.0
    %319 = vmatprep.subr.mxu0 0.0
    %320 = vmatpush1.xpose.msra.mxu0 0.0
    %321 = vmatprep.subr.mxu0 0.0
    %322 = vmatpush1.xpose.msra.mxu0 0.0
    %323 = vmatprep.subr.mxu0 0.0
    %324 = vmatpush1.xpose.msra.mxu0 0.0
    %325 = vmatprep.subr.mxu0 0.0
    %326 = vmatpush1.xpose.msra.mxu0 0.0
    %327 = vmatprep.subr.mxu0 0.0
    %328 = vmatpush1.xpose.msra.mxu0 0.0
    %329 = vmatprep.subr.mxu0 0.0
    %330 = vmatpush1.xpose.msra.mxu0 0.0
    %331 = vmatprep.subr.mxu0 0.0
    %332 = vmatpush1.xpose.msra.mxu0 0.0
    %333 = vmatprep.subr.mxu0 0.0
    %334 = vmatpush1.xpose.msra.mxu0 0.0
    %335 = vmatprep.subr.mxu0 0.0
    %336 = vmatpush1.xpose.msra.mxu0 0.0
    %337 = vmatprep.subr.mxu0 0.0
    %338 = vmatpush1.xpose.msra.mxu0 0.0
    %339 = vmatprep.subr.mxu0 0.0
    %340 = vmatpush1.xpose.msra.mxu0 0.0
    %341 = vmatprep.subr.mxu0 0.0
    %342 = vmatpush1.xpose.msra.mxu0 0.0
    %343 = vmatprep.subr.mxu0 0.0
    %344 = vmatpush1.xpose.msra.mxu0 0.0
    %345 = vmatprep.subr.mxu0 0.0
    %346 = vmatpush1.xpose.msra.mxu0 0.0
    %347 = vmatprep.subr.mxu0 0.0
    %348 = vmatpush1.xpose.msra.mxu0 0.0
    %349 = vmatprep.subr.mxu0 0.0
    %350 = vmatpush1.xpose.msra.mxu0 0.0
    %351 = vmatprep.subr.mxu0 0.0
    %352 = vmatpush1.xpose.msra.mxu0 0.0
    %353 = vmatprep.subr.mxu0 0.0
    %354 = vmatpush1.xpose.msra.mxu0 0.0
    %355 = vmatprep.subr.mxu0 0.0
    %356 = vmatpush1.xpose.msra.mxu0 0.0
    %357 = vmatprep.subr.mxu0 0.0
    %358 = vmatpush1.xpose.msra.mxu0 0.0
    %359 = vmatprep.subr.mxu0 0.0
    %360 = vmatpush1.xpose.msra.mxu0 0.0
    %361 = vmatprep.subr.mxu0 0.0
    %362 = vmatpush1.xpose.msra.mxu0 0.0
    %363 = vmatprep.subr.mxu0 0.0
    %364 = vmatpush1.xpose.msra.mxu0 0.0
    %365 = vmatprep.subr.mxu0 0.0
    %366 = vmatpush1.xpose.msra.mxu0 0.0
    %367 = vmatprep.mubr.f32.mxu0 0.0
    %368 = vmatmul.mubr.f32.gmra.mrb[0].mxu0 %v299
    %v369 = vpop.f32.mrb[0].mxu0
    %v370 = vadd.f32 0.0, %v369
    %v371 = vpop.f32.mrb[0].mxu0
    %372 = vdwg.mxu0
    %373 = vrot.lane.b32.xlu0 %v194, 96
    %v374 = vpop.permute.xlu0 %373
    %v376 = vsel %vm220, %v207, 0
    %v378 = vsel %vm220, %v374, 0
    %380 = vmatprep.subr.mxu0 0.0
    %381 = vmatpush1.xpose.msra.mxu0 %v378
    %382 = vmatprep.subr.mxu0 0.0
    %383 = vmatpush1.xpose.msra.mxu0 0.0
    %384 = vmatprep.subr.mxu0 0.0
    %385 = vmatpush1.xpose.msra.mxu0 0.0
    %386 = vmatprep.subr.mxu0 0.0
    %387 = vmatpush1.xpose.msra.mxu0 0.0
    %388 = vmatprep.subr.mxu0 0.0
    %389 = vmatpush1.xpose.msra.mxu0 0.0
    %390 = vmatprep.subr.mxu0 0.0
    %391 = vmatpush1.xpose.msra.mxu0 0.0
    %392 = vmatprep.subr.mxu0 0.0
    %393 = vmatpush1.xpose.msra.mxu0 0.0
    %394 = vmatprep.subr.mxu0 0.0
    %395 = vmatpush1.xpose.msra.mxu0 0.0
    %396 = vmatprep.subr.mxu0 0.0
    %397 = vmatpush1.xpose.msra.mxu0 0.0
    %398 = vmatprep.subr.mxu0 0.0
    %399 = vmatpush1.xpose.msra.mxu0 0.0
    %400 = vmatprep.subr.mxu0 0.0
    %401 = vmatpush1.xpose.msra.mxu0 0.0
    %402 = vmatprep.subr.mxu0 0.0
    %403 = vmatpush1.xpose.msra.mxu0 0.0
    %404 = vmatprep.subr.mxu0 0.0
    %405 = vmatpush1.xpose.msra.mxu0 0.0
    %406 = vmatprep.subr.mxu0 0.0
    %407 = vmatpush1.xpose.msra.mxu0 0.0
    %408 = vmatprep.subr.mxu0 0.0
    %409 = vmatpush1.xpose.msra.mxu0 0.0
    %410 = vmatprep.subr.mxu0 0.0
    %411 = vmatpush1.xpose.msra.mxu0 0.0
    %412 = vmatprep.subr.mxu0 0.0
    %413 = vmatpush1.xpose.msra.mxu0 0.0
    %414 = vmatprep.subr.mxu0 0.0
    %415 = vmatpush1.xpose.msra.mxu0 0.0
    %416 = vmatprep.subr.mxu0 0.0
    %417 = vmatpush1.xpose.msra.mxu0 0.0
    %418 = vmatprep.subr.mxu0 0.0
    %419 = vmatpush1.xpose.msra.mxu0 0.0
    %420 = vmatprep.subr.mxu0 0.0
    %421 = vmatpush1.xpose.msra.mxu0 0.0
    %422 = vmatprep.subr.mxu0 0.0
    %423 = vmatpush1.xpose.msra.mxu0 0.0
    %424 = vmatprep.subr.mxu0 0.0
    %425 = vmatpush1.xpose.msra.mxu0 0.0
    %426 = vmatprep.subr.mxu0 0.0
    %427 = vmatpush1.xpose.msra.mxu0 0.0
    %428 = vmatprep.subr.mxu0 0.0
    %429 = vmatpush1.xpose.msra.mxu0 0.0
    %430 = vmatprep.subr.mxu0 0.0
    %431 = vmatpush1.xpose.msra.mxu0 0.0
    %432 = vmatprep.subr.mxu0 0.0
    %433 = vmatpush1.xpose.msra.mxu0 0.0
    %434 = vmatprep.subr.mxu0 0.0
    %435 = vmatpush1.xpose.msra.mxu0 0.0
    %436 = vmatprep.subr.mxu0 0.0
    %437 = vmatpush1.xpose.msra.mxu0 0.0
    %438 = vmatprep.subr.mxu0 0.0
    %439 = vmatpush1.xpose.msra.mxu0 0.0
    %440 = vmatprep.subr.mxu0 0.0
    %441 = vmatpush1.xpose.msra.mxu0 0.0
    %442 = vmatprep.subr.mxu0 0.0
    %443 = vmatpush1.xpose.msra.mxu0 0.0
    %444 = vmatprep.mubr.f32.mxu0 0.0
    %445 = vmatmul.mubr.f32.gmra.mrb[0].mxu0 %v376
    %v446 = vpop.f32.mrb[0].mxu0
    %v447 = vadd.f32 0.0, %v446
    %v448 = vpop.f32.mrb[0].mxu0
    %449 = vdwg.mxu0
    %450 = vrot.lane.b32.xlu0 %v200, 96
    %v451 = vpop.permute.xlu0 %450
    %v453 = vsel %vm220, %v208, 0
    %v455 = vsel %vm220, %v451, 0
    %457 = vmatprep.subr.mxu0 0.0
    %458 = vmatpush1.xpose.msra.mxu0 %v455
    %459 = vmatprep.subr.mxu0 0.0
    %460 = vmatpush1.xpose.msra.mxu0 0.0
    %461 = vmatprep.subr.mxu0 0.0
    %462 = vmatpush1.xpose.msra.mxu0 0.0
    %463 = vmatprep.subr.mxu0 0.0
    %464 = vmatpush1.xpose.msra.mxu0 0.0
    %465 = vmatprep.subr.mxu0 0.0
    %466 = vmatpush1.xpose.msra.mxu0 0.0
    %467 = vmatprep.subr.mxu0 0.0
    %468 = vmatpush1.xpose.msra.mxu0 0.0
    %469 = vmatprep.subr.mxu0 0.0
    %470 = vmatpush1.xpose.msra.mxu0 0.0
    %471 = vmatprep.subr.mxu0 0.0
    %472 = vmatpush1.xpose.msra.mxu0 0.0
    %473 = vmatprep.subr.mxu0 0.0
    %474 = vmatpush1.xpose.msra.mxu0 0.0
    %475 = vmatprep.subr.mxu0 0.0
    %476 = vmatpush1.xpose.msra.mxu0 0.0
    %477 = vmatprep.subr.mxu0 0.0
    %478 = vmatpush1.xpose.msra.mxu0 0.0
    %479 = vmatprep.subr.mxu0 0.0
    %480 = vmatpush1.xpose.msra.mxu0 0.0
    %481 = vmatprep.subr.mxu0 0.0
    %482 = vmatpush1.xpose.msra.mxu0 0.0
    %483 = vmatprep.subr.mxu0 0.0
    %484 = vmatpush1.xpose.msra.mxu0 0.0
    %485 = vmatprep.subr.mxu0 0.0
    %486 = vmatpush1.xpose.msra.mxu0 0.0
    %487 = vmatprep.subr.mxu0 0.0
    %488 = vmatpush1.xpose.msra.mxu0 0.0
    %489 = vmatprep.subr.mxu0 0.0
    %490 = vmatpush1.xpose.msra.mxu0 0.0
    %491 = vmatprep.subr.mxu0 0.0
    %492 = vmatpush1.xpose.msra.mxu0 0.0
    %493 = vmatprep.subr.mxu0 0.0
    %494 = vmatpush1.xpose.msra.mxu0 0.0
    %495 = vmatprep.subr.mxu0 0.0
    %496 = vmatpush1.xpose.msra.mxu0 0.0
    %497 = vmatprep.subr.mxu0 0.0
    %498 = vmatpush1.xpose.msra.mxu0 0.0
    %499 = vmatprep.subr.mxu0 0.0
    %500 = vmatpush1.xpose.msra.mxu0 0.0
    %501 = vmatprep.subr.mxu0 0.0
    %502 = vmatpush1.xpose.msra.mxu0 0.0
    %503 = vmatprep.subr.mxu0 0.0
    %504 = vmatpush1.xpose.msra.mxu0 0.0
    %505 = vmatprep.subr.mxu0 0.0
    %506 = vmatpush1.xpose.msra.mxu0 0.0
    %507 = vmatprep.subr.mxu0 0.0
    %508 = vmatpush1.xpose.msra.mxu0 0.0
    %509 = vmatprep.subr.mxu0 0.0
    %510 = vmatpush1.xpose.msra.mxu0 0.0
    %511 = vmatprep.subr.mxu0 0.0
    %512 = vmatpush1.xpose.msra.mxu0 0.0
    %513 = vmatprep.subr.mxu0 0.0
    %514 = vmatpush1.xpose.msra.mxu0 0.0
    %515 = vmatprep.subr.mxu0 0.0
    %516 = vmatpush1.xpose.msra.mxu0 0.0
    %517 = vmatprep.subr.mxu0 0.0
    %518 = vmatpush1.xpose.msra.mxu0 0.0
    %519 = vmatprep.subr.mxu0 0.0
    %520 = vmatpush1.xpose.msra.mxu0 0.0
    %521 = vmatprep.mubr.f32.mxu0 0.0
    %522 = vmatmul.mubr.f32.gmra.mrb[0].mxu0 %v453
    %v523 = vpop.f32.mrb[0].mxu0
    %v524 = vadd.f32 0.0, %v523
    %v525 = vpop.f32.mrb[0].mxu0
    %526 = vdwg.mxu0
    %527 = vrot.lane.b32.xlu0 %v182, 96
    %v528 = vpop.permute.xlu0 %527
    %v530 = vsel %vm220, %v209, 0
    %v532 = vsel %vm220, %v528, 0
    %534 = vmatprep.subr.mxu0 0.0
    %535 = vmatpush1.xpose.msra.mxu0 %v532
    %536 = vmatprep.subr.mxu0 0.0
    %537 = vmatpush1.xpose.msra.mxu0 0.0
    %538 = vmatprep.subr.mxu0 0.0
    %539 = vmatpush1.xpose.msra.mxu0 0.0
    %540 = vmatprep.subr.mxu0 0.0
    %541 = vmatpush1.xpose.msra.mxu0 0.0
    %542 = vmatprep.subr.mxu0 0.0
    %543 = vmatpush1.xpose.msra.mxu0 0.0
    %544 = vmatprep.subr.mxu0 0.0
    %545 = vmatpush1.xpose.msra.mxu0 0.0
    %546 = vmatprep.subr.mxu0 0.0
    %547 = vmatpush1.xpose.msra.mxu0 0.0
    %548 = vmatprep.subr.mxu0 0.0
    %549 = vmatpush1.xpose.msra.mxu0 0.0
    %550 = vmatprep.subr.mxu0 0.0
    %551 = vmatpush1.xpose.msra.mxu0 0.0
    %552 = vmatprep.subr.mxu0 0.0
    %553 = vmatpush1.xpose.msra.mxu0 0.0
    %554 = vmatprep.subr.mxu0 0.0
    %555 = vmatpush1.xpose.msra.mxu0 0.0
    %556 = vmatprep.subr.mxu0 0.0
    %557 = vmatpush1.xpose.msra.mxu0 0.0
    %558 = vmatprep.subr.mxu0 0.0
    %559 = vmatpush1.xpose.msra.mxu0 0.0
    %560 = vmatprep.subr.mxu0 0.0
    %561 = vmatpush1.xpose.msra.mxu0 0.0
    %562 = vmatprep.subr.mxu0 0.0
    %563 = vmatpush1.xpose.msra.mxu0 0.0
    %564 = vmatprep.subr.mxu0 0.0
    %565 = vmatpush1.xpose.msra.mxu0 0.0
    %566 = vmatprep.subr.mxu0 0.0
    %567 = vmatpush1.xpose.msra.mxu0 0.0
    %568 = vmatprep.subr.mxu0 0.0
    %569 = vmatpush1.xpose.msra.mxu0 0.0
    %570 = vmatprep.subr.mxu0 0.0
    %571 = vmatpush1.xpose.msra.mxu0 0.0
    %572 = vmatprep.subr.mxu0 0.0
    %573 = vmatpush1.xpose.msra.mxu0 0.0
    %574 = vmatprep.subr.mxu0 0.0
    %575 = vmatpush1.xpose.msra.mxu0 0.0
    %576 = vmatprep.subr.mxu0 0.0
    %577 = vmatpush1.xpose.msra.mxu0 0.0
    %578 = vmatprep.subr.mxu0 0.0
    %579 = vmatpush1.xpose.msra.mxu0 0.0
    %580 = vmatprep.subr.mxu0 0.0
    %581 = vmatpush1.xpose.msra.mxu0 0.0
    %582 = vmatprep.subr.mxu0 0.0
    %583 = vmatpush1.xpose.msra.mxu0 0.0
    %584 = vmatprep.subr.mxu0 0.0
    %585 = vmatpush1.xpose.msra.mxu0 0.0
    %586 = vmatprep.subr.mxu0 0.0
    %587 = vmatpush1.xpose.msra.mxu0 0.0
    %588 = vmatprep.subr.mxu0 0.0
    %589 = vmatpush1.xpose.msra.mxu0 0.0
    %590 = vmatprep.subr.mxu0 0.0
    %591 = vmatpush1.xpose.msra.mxu0 0.0
    %592 = vmatprep.subr.mxu0 0.0
    %593 = vmatpush1.xpose.msra.mxu0 0.0
    %594 = vmatprep.subr.mxu0 0.0
    %595 = vmatpush1.xpose.msra.mxu0 0.0
    %596 = vmatprep.subr.mxu0 0.0
    %597 = vmatpush1.xpose.msra.mxu0 0.0
    %598 = vmatprep.mubr.f32.mxu0 0.0
    %599 = vmatmul.mubr.f32.gmra.mrb[0].mxu0 %v530
    %v600 = vpop.f32.mrb[0].mxu0
    %v601 = vadd.f32 0.0, %v600
    %v602 = vpop.f32.mrb[0].mxu0
    %603 = vdwg.mxu0
    %604 = vrot.lane.b32.xlu0 %v190, 96
    %v605 = vpop.permute.xlu0 %604
    %v607 = vsel %vm220, %v210, 0
    %v609 = vsel %vm220, %v605, 0
    %611 = vmatprep.subr.mxu0 0.0
    %612 = vmatpush1.xpose.msra.mxu0 %v609
    %613 = vmatprep.subr.mxu0 0.0
    %614 = vmatpush1.xpose.msra.mxu0 0.0
    %615 = vmatprep.subr.mxu0 0.0
    %616 = vmatpush1.xpose.msra.mxu0 0.0
    %617 = vmatprep.subr.mxu0 0.0
    %618 = vmatpush1.xpose.msra.mxu0 0.0
    %619 = vmatprep.subr.mxu0 0.0
    %620 = vmatpush1.xpose.msra.mxu0 0.0
    %621 = vmatprep.subr.mxu0 0.0
    %622 = vmatpush1.xpose.msra.mxu0 0.0
    %623 = vmatprep.subr.mxu0 0.0
    %624 = vmatpush1.xpose.msra.mxu0 0.0
    %625 = vmatprep.subr.mxu0 0.0
    %626 = vmatpush1.xpose.msra.mxu0 0.0
    %627 = vmatprep.subr.mxu0 0.0
    %628 = vmatpush1.xpose.msra.mxu0 0.0
    %629 = vmatprep.subr.mxu0 0.0
    %630 = vmatpush1.xpose.msra.mxu0 0.0
    %631 = vmatprep.subr.mxu0 0.0
    %632 = vmatpush1.xpose.msra.mxu0 0.0
    %633 = vmatprep.subr.mxu0 0.0
    %634 = vmatpush1.xpose.msra.mxu0 0.0
    %635 = vmatprep.subr.mxu0 0.0
    %636 = vmatpush1.xpose.msra.mxu0 0.0
    %637 = vmatprep.subr.mxu0 0.0
    %638 = vmatpush1.xpose.msra.mxu0 0.0
    %639 = vmatprep.subr.mxu0 0.0
    %640 = vmatpush1.xpose.msra.mxu0 0.0
    %641 = vmatprep.subr.mxu0 0.0
    %642 = vmatpush1.xpose.msra.mxu0 0.0
    %643 = vmatprep.subr.mxu0 0.0
    %644 = vmatpush1.xpose.msra.mxu0 0.0
    %645 = vmatprep.subr.mxu0 0.0
    %646 = vmatpush1.xpose.msra.mxu0 0.0
    %647 = vmatprep.subr.mxu0 0.0
    %648 = vmatpush1.xpose.msra.mxu0 0.0
    %649 = vmatprep.subr.mxu0 0.0
    %650 = vmatpush1.xpose.msra.mxu0 0.0
    %651 = vmatprep.subr.mxu0 0.0
    %652 = vmatpush1.xpose.msra.mxu0 0.0
    %653 = vmatprep.subr.mxu0 0.0
    %654 = vmatpush1.xpose.msra.mxu0 0.0
    %655 = vmatprep.subr.mxu0 0.0
    %656 = vmatpush1.xpose.msra.mxu0 0.0
    %657 = vmatprep.subr.mxu0 0.0
    %658 = vmatpush1.xpose.msra.mxu0 0.0
    %659 = vmatprep.subr.mxu0 0.0
    %660 = vmatpush1.xpose.msra.mxu0 0.0
    %661 = vmatprep.subr.mxu0 0.0
    %662 = vmatpush1.xpose.msra.mxu0 0.0
    %663 = vmatprep.subr.mxu0 0.0
    %664 = vmatpush1.xpose.msra.mxu0 0.0
    %665 = vmatprep.subr.mxu0 0.0
    %666 = vmatpush1.xpose.msra.mxu0 0.0
    %667 = vmatprep.subr.mxu0 0.0
    %668 = vmatpush1.xpose.msra.mxu0 0.0
    %669 = vmatprep.subr.mxu0 0.0
    %670 = vmatpush1.xpose.msra.mxu0 0.0
    %671 = vmatprep.subr.mxu0 0.0
    %672 = vmatpush1.xpose.msra.mxu0 0.0
    %673 = vmatprep.subr.mxu0 0.0
    %674 = vmatpush1.xpose.msra.mxu0 0.0
    %675 = vmatprep.mubr.f32.mxu0 0.0
    %676 = vmatmul.mubr.f32.gmra.mrb[0].mxu0 %v607
    %v677 = vpop.f32.mrb[0].mxu0
    %v678 = vadd.f32 0.0, %v677
    %v679 = vpop.f32.mrb[0].mxu0
    %680 = vdwg.mxu0
    %681 = vrot.lane.b32.xlu0 %v196, 96
    %v682 = vpop.permute.xlu0 %681
    %v684 = vsel %vm220, %v211, 0
    %v686 = vsel %vm220, %v682, 0
    %688 = vmatprep.subr.mxu0 0.0
    %689 = vmatpush1.xpose.msra.mxu0 %v686
    %690 = vmatprep.subr.mxu0 0.0
    %691 = vmatpush1.xpose.msra.mxu0 0.0
    %692 = vmatprep.subr.mxu0 0.0
    %693 = vmatpush1.xpose.msra.mxu0 0.0
    %694 = vmatprep.subr.mxu0 0.0
    %695 = vmatpush1.xpose.msra.mxu0 0.0
    %696 = vmatprep.subr.mxu0 0.0
    %697 = vmatpush1.xpose.msra.mxu0 0.0
    %698 = vmatprep.subr.mxu0 0.0
    %699 = vmatpush1.xpose.msra.mxu0 0.0
    %700 = vmatprep.subr.mxu0 0.0
    %701 = vmatpush1.xpose.msra.mxu0 0.0
    %702 = vmatprep.subr.mxu0 0.0
    %703 = vmatpush1.xpose.msra.mxu0 0.0
    %704 = vmatprep.subr.mxu0 0.0
    %705 = vmatpush1.xpose.msra.mxu0 0.0
    %706 = vmatprep.subr.mxu0 0.0
    %707 = vmatpush1.xpose.msra.mxu0 0.0
    %708 = vmatprep.subr.mxu0 0.0
    %709 = vmatpush1.xpose.msra.mxu0 0.0
    %710 = vmatprep.subr.mxu0 0.0
    %711 = vmatpush1.xpose.msra.mxu0 0.0
    %712 = vmatprep.subr.mxu0 0.0
    %713 = vmatpush1.xpose.msra.mxu0 0.0
    %714 = vmatprep.subr.mxu0 0.0
    %715 = vmatpush1.xpose.msra.mxu0 0.0
    %716 = vmatprep.subr.mxu0 0.0
    %717 = vmatpush1.xpose.msra.mxu0 0.0
    %718 = vmatprep.subr.mxu0 0.0
    %719 = vmatpush1.xpose.msra.mxu0 0.0
    %720 = vmatprep.subr.mxu0 0.0
    %721 = vmatpush1.xpose.msra.mxu0 0.0
    %722 = vmatprep.subr.mxu0 0.0
    %723 = vmatpush1.xpose.msra.mxu0 0.0
    %724 = vmatprep.subr.mxu0 0.0
    %725 = vmatpush1.xpose.msra.mxu0 0.0
    %726 = vmatprep.subr.mxu0 0.0
    %727 = vmatpush1.xpose.msra.mxu0 0.0
    %728 = vmatprep.subr.mxu0 0.0
    %729 = vmatpush1.xpose.msra.mxu0 0.0
    %730 = vmatprep.subr.mxu0 0.0
    %731 = vmatpush1.xpose.msra.mxu0 0.0
    %732 = vmatprep.subr.mxu0 0.0
    %733 = vmatpush1.xpose.msra.mxu0 0.0
    %734 = vmatprep.subr.mxu0 0.0
    %735 = vmatpush1.xpose.msra.mxu0 0.0
    %736 = vmatprep.subr.mxu0 0.0
    %737 = vmatpush1.xpose.msra.mxu0 0.0
    %738 = vmatprep.subr.mxu0 0.0
    %739 = vmatpush1.xpose.msra.mxu0 0.0
    %740 = vmatprep.subr.mxu0 0.0
    %741 = vmatpush1.xpose.msra.mxu0 0.0
    %742 = vmatprep.subr.mxu0 0.0
    %743 = vmatpush1.xpose.msra.mxu0 0.0
    %744 = vmatprep.subr.mxu0 0.0
    %745 = vmatpush1.xpose.msra.mxu0 0.0
    %746 = vmatprep.subr.mxu0 0.0
    %747 = vmatpush1.xpose.msra.mxu0 0.0
    %748 = vmatprep.subr.mxu0 0.0
    %749 = vmatpush1.xpose.msra.mxu0 0.0
    %750 = vmatprep.subr.mxu0 0.0
    %751 = vmatpush1.xpose.msra.mxu0 0.0
    %752 = vmatprep.mubr.f32.mxu0 0.0
    %753 = vmatmul.mubr.f32.gmra.mrb[0].mxu0 %v684
    %v754 = vpop.f32.mrb[0].mxu0
    %v755 = vadd.f32 0.0, %v754
    %v756 = vpop.f32.mrb[0].mxu0
    %757 = vdwg.mxu0
    %758 = vrot.lane.b32.xlu0 %v202, 96
    %v759 = vpop.permute.xlu0 %758
    %v761 = vsel %vm220, %v212, 0
    %v763 = vsel %vm220, %v759, 0
    %765 = vmatprep.subr.mxu0 0.0
    %766 = vmatpush1.xpose.msra.mxu0 %v763
    %767 = vmatprep.subr.mxu0 0.0
    %768 = vmatpush1.xpose.msra.mxu0 0.0
    %769 = vmatprep.subr.mxu0 0.0
    %770 = vmatpush1.xpose.msra.mxu0 0.0
    %771 = vmatprep.subr.mxu0 0.0
    %772 = vmatpush1.xpose.msra.mxu0 0.0
    %773 = vmatprep.subr.mxu0 0.0
    %774 = vmatpush1.xpose.msra.mxu0 0.0
    %775 = vmatprep.subr.mxu0 0.0
    %776 = vmatpush1.xpose.msra.mxu0 0.0
    %777 = vmatprep.subr.mxu0 0.0
    %778 = vmatpush1.xpose.msra.mxu0 0.0
    %779 = vmatprep.subr.mxu0 0.0
    %780 = vmatpush1.xpose.msra.mxu0 0.0
    %781 = vmatprep.subr.mxu0 0.0
    %782 = vmatpush1.xpose.msra.mxu0 0.0
    %783 = vmatprep.subr.mxu0 0.0
    %784 = vmatpush1.xpose.msra.mxu0 0.0
    %785 = vmatprep.subr.mxu0 0.0
    %786 = vmatpush1.xpose.msra.mxu0 0.0
    %787 = vmatprep.subr.mxu0 0.0
    %788 = vmatpush1.xpose.msra.mxu0 0.0
    %789 = vmatprep.subr.mxu0 0.0
    %790 = vmatpush1.xpose.msra.mxu0 0.0
    %791 = vmatprep.subr.mxu0 0.0
    %792 = vmatpush1.xpose.msra.mxu0 0.0
    %793 = vmatprep.subr.mxu0 0.0
    %794 = vmatpush1.xpose.msra.mxu0 0.0
    %795 = vmatprep.subr.mxu0 0.0
    %796 = vmatpush1.xpose.msra.mxu0 0.0
    %797 = vmatprep.subr.mxu0 0.0
    %798 = vmatpush1.xpose.msra.mxu0 0.0
    %799 = vmatprep.subr.mxu0 0.0
    %800 = vmatpush1.xpose.msra.mxu0 0.0
    %801 = vmatprep.subr.mxu0 0.0
    %802 = vmatpush1.xpose.msra.mxu0 0.0
    %803 = vmatprep.subr.mxu0 0.0
    %804 = vmatpush1.xpose.msra.mxu0 0.0
    %805 = vmatprep.subr.mxu0 0.0
    %806 = vmatpush1.xpose.msra.mxu0 0.0
    %807 = vmatprep.subr.mxu0 0.0
    %808 = vmatpush1.xpose.msra.mxu0 0.0
    %809 = vmatprep.subr.mxu0 0.0
    %810 = vmatpush1.xpose.msra.mxu0 0.0
    %811 = vmatprep.subr.mxu0 0.0
    %812 = vmatpush1.xpose.msra.mxu0 0.0
    %813 = vmatprep.subr.mxu0 0.0
    %814 = vmatpush1.xpose.msra.mxu0 0.0
    %815 = vmatprep.subr.mxu0 0.0
    %816 = vmatpush1.xpose.msra.mxu0 0.0
    %817 = vmatprep.subr.mxu0 0.0
    %818 = vmatpush1.xpose.msra.mxu0 0.0
    %819 = vmatprep.subr.mxu0 0.0
    %820 = vmatpush1.xpose.msra.mxu0 0.0
    %821 = vmatprep.subr.mxu0 0.0
    %822 = vmatpush1.xpose.msra.mxu0 0.0
    %823 = vmatprep.subr.mxu0 0.0
    %824 = vmatpush1.xpose.msra.mxu0 0.0
    %825 = vmatprep.subr.mxu0 0.0
    %826 = vmatpush1.xpose.msra.mxu0 0.0
    %827 = vmatprep.subr.mxu0 0.0
    %828 = vmatpush1.xpose.msra.mxu0 0.0
    %829 = vmatprep.mubr.f32.mxu0 0.0
    %830 = vmatmul.mubr.f32.gmra.mrb[0].mxu0 %v761
    %v831 = vpop.f32.mrb[0].mxu0
    %v832 = vadd.f32 0.0, %v831
    %v833 = vpop.f32.mrb[0].mxu0
    %834 = vdwg.mxu0
    %v835 = vsel %vm217, 1, 0
    %vm836 = vcmp.eq.s32.totalorder %v835, 1
    %v837 = vsel %vm836, %v293, -1e+30
    %v838 = vsel %vm836, %v370, -1e+30
    %v839 = vsel %vm836, %v447, -1e+30
    %v840 = vsel %vm836, %v524, -1e+30
    %v841 = vsel %vm836, %v601, -1e+30
    %v842 = vsel %vm836, %v678, -1e+30
    %v843 = vsel %vm836, %v755, -1e+30
    %v844 = vsel %vm836, %v832, -1e+30
    %v845 = vsel %vm220, %v837, -inf
    %846 = vmax.xlane.f32.xlu0 %v845
    %v847 = vpop.xlane.xlu0 %846
    %v848 = vsel %vm220, %v838, -inf
    %849 = vmax.xlane.f32.xlu0 %v848
    %v850 = vpop.xlane.xlu0 %849
    %v851 = vsel %vm220, %v839, -inf
    %852 = vmax.xlane.f32.xlu0 %v851
    %v853 = vpop.xlane.xlu0 %852
    %v854 = vsel %vm220, %v840, -inf
    %855 = vmax.xlane.f32.xlu0 %v854
    %v856 = vpop.xlane.xlu0 %855
    %v857 = vsel %vm220, %v841, -inf
    %858 = vmax.xlane.f32.xlu0 %v857
    %v859 = vpop.xlane.xlu0 %858
    %v860 = vsel %vm220, %v842, -inf
    %861 = vmax.xlane.f32.xlu0 %v860
    %v862 = vpop.xlane.xlu0 %861
    %v863 = vsel %vm220, %v843, -inf
    %864 = vmax.xlane.f32.xlu0 %v863
    %v865 = vpop.xlane.xlu0 %864
    %v866 = vsel %vm220, %v844, -inf
    %867 = vmax.xlane.f32.xlu0 %v866
    %v868 = vpop.xlane.xlu0 %867
    %v869 = vsub.f32 %v837, %v847
    %v870 = vsub.f32 %v838, %v850
    %v871 = vsub.f32 %v839, %v853
    %v872 = vsub.f32 %v840, %v856
    %v873 = vsub.f32 %v841, %v859
    %v874 = vsub.f32 %v842, %v862
    %v875 = vsub.f32 %v843, %v865
    %v876 = vsub.f32 %v844, %v868
    %v877 = vmul.f32 %v869, 1.442695
    %v878 = vpow.pop %v877
    %v879 = vmul.f32 %v870, 1.442695
    %v880 = vpow.pop %v879
    %v881 = vmul.f32 %v871, 1.442695
    %v882 = vpow.pop %v881
    %v883 = vmul.f32 %v872, 1.442695
    %v884 = vpow.pop %v883
    %v885 = vmul.f32 %v873, 1.442695
    %v886 = vpow.pop %v885
    %v887 = vmul.f32 %v874, 1.442695
    %v888 = vpow.pop %v887
    %v889 = vmul.f32 %v875, 1.442695
    %v890 = vpow.pop %v889
    %v891 = vmul.f32 %v876, 1.442695
    %v892 = vpow.pop %v891
    %v893 = vsel %vm220, %v878, 0.0
    %894 = vadd.xlane.f32.xlu0 %v893
    %v895 = vpop.xlane.xlu0 %894
    %v896 = vsel %vm220, %v880, 0.0
    %897 = vadd.xlane.f32.xlu0 %v896
    %v898 = vpop.xlane.xlu0 %897
    %v899 = vsel %vm220, %v882, 0.0
    %900 = vadd.xlane.f32.xlu0 %v899
    %v901 = vpop.xlane.xlu0 %900
    %v902 = vsel %vm220, %v884, 0.0
    %903 = vadd.xlane.f32.xlu0 %v902
    %v904 = vpop.xlane.xlu0 %903
    %v905 = vsel %vm220, %v886, 0.0
    %906 = vadd.xlane.f32.xlu0 %v905
    %v907 = vpop.xlane.xlu0 %906
    %v908 = vsel %vm220, %v888, 0.0
    %909 = vadd.xlane.f32.xlu0 %v908
    %v910 = vpop.xlane.xlu0 %909
    %v911 = vsel %vm220, %v890, 0.0
    %912 = vadd.xlane.f32.xlu0 %v911
    %v913 = vpop.xlane.xlu0 %912
    %v914 = vsel %vm220, %v892, 0.0
    %915 = vadd.xlane.f32.xlu0 %v914
    %v916 = vpop.xlane.xlu0 %915
    %v917 = vrcp.pop %v895
    %v918 = vrcp.pop %v898
    %v919 = vrcp.pop %v901
    %v920 = vrcp.pop %v904
    %v921 = vrcp.pop %v907
    %v922 = vrcp.pop %v910
    %v923 = vrcp.pop %v913
    %v924 = vrcp.pop %v916
    %v925 = vmul.f32 %v878, %v917
    %v926 = vmul.f32 %v880, %v918
    %v927 = vmul.f32 %v882, %v919
    %v928 = vmul.f32 %v884, %v920
    %v929 = vmul.f32 %v886, %v921
    %v930 = vmul.f32 %v888, %v922
    %v931 = vmul.f32 %v890, %v923
    %v932 = vmul.f32 %v892, %v924
    %933 = vrot.lane.b32.xlu0 %v177, 64
    %v934 = vpop.permute.xlu0 %933
    %v937 = vsel %vm220, %v925, 0
    %939 = vmatprep.subr.mxu0 0.0
    %940 = vmatpush1.msra.mxu0 %v934
    %941 = vmatprep.subr.mxu0 0.0
    %942 = vmatpush1.msra.mxu0 0.0
    %943 = vmatprep.subr.mxu0 0.0
    %944 = vmatpush1.msra.mxu0 0.0
    %945 = vmatprep.subr.mxu0 0.0
    %946 = vmatpush1.msra.mxu0 0.0
    %947 = vmatprep.subr.mxu0 0.0
    %948 = vmatpush1.msra.mxu0 0.0
    %949 = vmatprep.subr.mxu0 0.0
    %950 = vmatpush1.msra.mxu0 0.0
    %951 = vmatprep.subr.mxu0 0.0
    %952 = vmatpush1.msra.mxu0 0.0
    %953 = vmatprep.subr.mxu0 0.0
    %954 = vmatpush1.msra.mxu0 0.0
    %955 = vmatprep.subr.mxu0 0.0
    %956 = vmatpush1.msra.mxu0 0.0
    %957 = vmatprep.subr.mxu0 0.0
    %958 = vmatpush1.msra.mxu0 0.0
    %959 = vmatprep.subr.mxu0 0.0
    %960 = vmatpush1.msra.mxu0 0.0
    %961 = vmatprep.subr.mxu0 0.0
    %962 = vmatpush1.msra.mxu0 0.0
    %963 = vmatprep.subr.mxu0 0.0
    %964 = vmatpush1.msra.mxu0 0.0
    %965 = vmatprep.subr.mxu0 0.0
    %966 = vmatpush1.msra.mxu0 0.0
    %967 = vmatprep.subr.mxu0 0.0
    %968 = vmatpush1.msra.mxu0 0.0
    %969 = vmatprep.subr.mxu0 0.0
    %970 = vmatpush1.msra.mxu0 0.0
    %971 = vmatprep.subr.mxu0 0.0
    %972 = vmatpush1.msra.mxu0 0.0
    %973 = vmatprep.subr.mxu0 0.0
    %974 = vmatpush1.msra.mxu0 0.0
    %975 = vmatprep.subr.mxu0 0.0
    %976 = vmatpush1.msra.mxu0 0.0
    %977 = vmatprep.subr.mxu0 0.0
    %978 = vmatpush1.msra.mxu0 0.0
    %979 = vmatprep.subr.mxu0 0.0
    %980 = vmatpush1.msra.mxu0 0.0
    %981 = vmatprep.subr.mxu0 0.0
    %982 = vmatpush1.msra.mxu0 0.0
    %983 = vmatprep.subr.mxu0 0.0
    %984 = vmatpush1.msra.mxu0 0.0
    %985 = vmatprep.subr.mxu0 0.0
    %986 = vmatpush1.msra.mxu0 0.0
    %987 = vmatprep.subr.mxu0 0.0
    %988 = vmatpush1.msra.mxu0 0.0
    %989 = vmatprep.subr.mxu0 0.0
    %990 = vmatpush1.msra.mxu0 0.0
    %991 = vmatprep.subr.mxu0 0.0
    %992 = vmatpush1.msra.mxu0 0.0
    %993 = vmatprep.subr.mxu0 0.0
    %994 = vmatpush1.msra.mxu0 0.0
    %995 = vmatprep.subr.mxu0 0.0
    %996 = vmatpush1.msra.mxu0 0.0
    %997 = vmatprep.subr.mxu0 0.0
    %998 = vmatpush1.msra.mxu0 0.0
    %999 = vmatprep.subr.mxu0 0.0
    %1000 = vmatpush1.msra.mxu0 0.0
    %1001 = vmatprep.subr.mxu0 0.0
    %1002 = vmatpush1.msra.mxu0 0.0
    %1003 = vmatprep.mubr.f32.mxu0 0.0
    %1004 = vmatmul.mubr.f32.gmra.mrb[0].mxu0 %v937
    %v1005 = vpop.f32.mrb[0].mxu0
    %v1006 = vadd.f32 0.0, %v1005
    %v1007 = vpop.f32.mrb[0].mxu0
    %1008 = vdwg.mxu0
    %1009 = vrot.lane.b32.xlu0 %v188, 64
    %v1010 = vpop.permute.xlu0 %1009
    %v1013 = vsel %vm220, %v926, 0
    %1015 = vmatprep.subr.mxu0 0.0
    %1016 = vmatpush1.msra.mxu0 %v1010
    %1017 = vmatprep.subr.mxu0 0.0
    %1018 = vmatpush1.msra.mxu0 0.0
    %1019 = vmatprep.subr.mxu0 0.0
    %1020 = vmatpush1.msra.mxu0 0.0
    %1021 = vmatprep.subr.mxu0 0.0
    %1022 = vmatpush1.msra.mxu0 0.0
    %1023 = vmatprep.subr.mxu0 0.0
    %1024 = vmatpush1.msra.mxu0 0.0
    %1025 = vmatprep.subr.mxu0 0.0
    %1026 = vmatpush1.msra.mxu0 0.0
    %1027 = vmatprep.subr.mxu0 0.0
    %1028 = vmatpush1.msra.mxu0 0.0
    %1029 = vmatprep.subr.mxu0 0.0
    %1030 = vmatpush1.msra.mxu0 0.0
    %1031 = vmatprep.subr.mxu0 0.0
    %1032 = vmatpush1.msra.mxu0 0.0
    %1033 = vmatprep.subr.mxu0 0.0
    %1034 = vmatpush1.msra.mxu0 0.0
    %1035 = vmatprep.subr.mxu0 0.0
    %1036 = vmatpush1.msra.mxu0 0.0
    %1037 = vmatprep.subr.mxu0 0.0
    %1038 = vmatpush1.msra.mxu0 0.0
    %1039 = vmatprep.subr.mxu0 0.0
    %1040 = vmatpush1.msra.mxu0 0.0
    %1041 = vmatprep.subr.mxu0 0.0
    %1042 = vmatpush1.msra.mxu0 0.0
    %1043 = vmatprep.subr.mxu0 0.0
    %1044 = vmatpush1.msra.mxu0 0.0
    %1045 = vmatprep.subr.mxu0 0.0
    %1046 = vmatpush1.msra.mxu0 0.0
    %1047 = vmatprep.subr.mxu0 0.0
    %1048 = vmatpush1.msra.mxu0 0.0
    %1049 = vmatprep.subr.mxu0 0.0
    %1050 = vmatpush1.msra.mxu0 0.0
    %1051 = vmatprep.subr.mxu0 0.0
    %1052 = vmatpush1.msra.mxu0 0.0
    %1053 = vmatprep.subr.mxu0 0.0
    %1054 = vmatpush1.msra.mxu0 0.0
    %1055 = vmatprep.subr.mxu0 0.0
    %1056 = vmatpush1.msra.mxu0 0.0
    %1057 = vmatprep.subr.mxu0 0.0
    %1058 = vmatpush1.msra.mxu0 0.0
    %1059 = vmatprep.subr.mxu0 0.0
    %1060 = vmatpush1.msra.mxu0 0.0
    %1061 = vmatprep.subr.mxu0 0.0
    %1062 = vmatpush1.msra.mxu0 0.0
    %1063 = vmatprep.subr.mxu0 0.0
    %1064 = vmatpush1.msra.mxu0 0.0
    %1065 = vmatprep.subr.mxu0 0.0
    %1066 = vmatpush1.msra.mxu0 0.0
    %1067 = vmatprep.subr.mxu0 0.0
    %1068 = vmatpush1.msra.mxu0 0.0
    %1069 = vmatprep.subr.mxu0 0.0
    %1070 = vmatpush1.msra.mxu0 0.0
    %1071 = vmatprep.subr.mxu0 0.0
    %1072 = vmatpush1.msra.mxu0 0.0
    %1073 = vmatprep.subr.mxu0 0.0
    %1074 = vmatpush1.msra.mxu0 0.0
    %1075 = vmatprep.subr.mxu0 0.0
    %1076 = vmatpush1.msra.mxu0 0.0
    %1077 = vmatprep.subr.mxu0 0.0
    %1078 = vmatpush1.msra.mxu0 0.0
    %1079 = vmatprep.mubr.f32.mxu0 0.0
    %1080 = vmatmul.mubr.f32.gmra.mrb[0].mxu0 %v1013
    %v1081 = vpop.f32.mrb[0].mxu0
    %v1082 = vadd.f32 0.0, %v1081
    %v1083 = vpop.f32.mrb[0].mxu0
    %1084 = vdwg.mxu0
    %1085 = vrot.lane.b32.xlu0 %v194, 64
    %v1086 = vpop.permute.xlu0 %1085
    %v1089 = vsel %vm220, %v927, 0
    %1091 = vmatprep.subr.mxu0 0.0
    %1092 = vmatpush1.msra.mxu0 %v1086
    %1093 = vmatprep.subr.mxu0 0.0
    %1094 = vmatpush1.msra.mxu0 0.0
    %1095 = vmatprep.subr.mxu0 0.0
    %1096 = vmatpush1.msra.mxu0 0.0
    %1097 = vmatprep.subr.mxu0 0.0
    %1098 = vmatpush1.msra.mxu0 0.0
    %1099 = vmatprep.subr.mxu0 0.0
    %1100 = vmatpush1.msra.mxu0 0.0
    %1101 = vmatprep.subr.mxu0 0.0
    %1102 = vmatpush1.msra.mxu0 0.0
    %1103 = vmatprep.subr.mxu0 0.0
    %1104 = vmatpush1.msra.mxu0 0.0
    %1105 = vmatprep.subr.mxu0 0.0
    %1106 = vmatpush1.msra.mxu0 0.0
    %1107 = vmatprep.subr.mxu0 0.0
    %1108 = vmatpush1.msra.mxu0 0.0
    %1109 = vmatprep.subr.mxu0 0.0
    %1110 = vmatpush1.msra.mxu0 0.0
    %1111 = vmatprep.subr.mxu0 0.0
    %1112 = vmatpush1.msra.mxu0 0.0
    %1113 = vmatprep.subr.mxu0 0.0
    %1114 = vmatpush1.msra.mxu0 0.0
    %1115 = vmatprep.subr.mxu0 0.0
    %1116 = vmatpush1.msra.mxu0 0.0
    %1117 = vmatprep.subr.mxu0 0.0
    %1118 = vmatpush1.msra.mxu0 0.0
    %1119 = vmatprep.subr.mxu0 0.0
    %1120 = vmatpush1.msra.mxu0 0.0
    %1121 = vmatprep.subr.mxu0 0.0
    %1122 = vmatpush1.msra.mxu0 0.0
    %1123 = vmatprep.subr.mxu0 0.0
    %1124 = vmatpush1.msra.mxu0 0.0
    %1125 = vmatprep.subr.mxu0 0.0
    %1126 = vmatpush1.msra.mxu0 0.0
    %1127 = vmatprep.subr.mxu0 0.0
    %1128 = vmatpush1.msra.mxu0 0.0
    %1129 = vmatprep.subr.mxu0 0.0
    %1130 = vmatpush1.msra.mxu0 0.0
    %1131 = vmatprep.subr.mxu0 0.0
    %1132 = vmatpush1.msra.mxu0 0.0
    %1133 = vmatprep.subr.mxu0 0.0
    %1134 = vmatpush1.msra.mxu0 0.0
    %1135 = vmatprep.subr.mxu0 0.0
    %1136 = vmatpush1.msra.mxu0 0.0
    %1137 = vmatprep.subr.mxu0 0.0
    %1138 = vmatpush1.msra.mxu0 0.0
    %1139 = vmatprep.subr.mxu0 0.0
    %1140 = vmatpush1.msra.mxu0 0.0
    %1141 = vmatprep.subr.mxu0 0.0
    %1142 = vmatpush1.msra.mxu0 0.0
    %1143 = vmatprep.subr.mxu0 0.0
    %1144 = vmatpush1.msra.mxu0 0.0
    %1145 = vmatprep.subr.mxu0 0.0
    %1146 = vmatpush1.msra.mxu0 0.0
    %1147 = vmatprep.subr.mxu0 0.0
    %1148 = vmatpush1.msra.mxu0 0.0
    %1149 = vmatprep.subr.mxu0 0.0
    %1150 = vmatpush1.msra.mxu0 0.0
    %1151 = vmatprep.subr.mxu0 0.0
    %1152 = vmatpush1.msra.mxu0 0.0
    %1153 = vmatprep.subr.mxu0 0.0
    %1154 = vmatpush1.msra.mxu0 0.0
    %1155 = vmatprep.mubr.f32.mxu0 0.0
    %1156 = vmatmul.mubr.f32.gmra.mrb[0].mxu0 %v1089
    %v1157 = vpop.f32.mrb[0].mxu0
    %v1158 = vadd.f32 0.0, %v1157
    %v1159 = vpop.f32.mrb[0].mxu0
    %1160 = vdwg.mxu0
    %1161 = vrot.lane.b32.xlu0 %v200, 64
    %v1162 = vpop.permute.xlu0 %1161
    %v1165 = vsel %vm220, %v928, 0
    %1167 = vmatprep.subr.mxu0 0.0
    %1168 = vmatpush1.msra.mxu0 %v1162
    %1169 = vmatprep.subr.mxu0 0.0
    %1170 = vmatpush1.msra.mxu0 0.0
    %1171 = vmatprep.subr.mxu0 0.0
    %1172 = vmatpush1.msra.mxu0 0.0
    %1173 = vmatprep.subr.mxu0 0.0
    %1174 = vmatpush1.msra.mxu0 0.0
    %1175 = vmatprep.subr.mxu0 0.0
    %1176 = vmatpush1.msra.mxu0 0.0
    %1177 = vmatprep.subr.mxu0 0.0
    %1178 = vmatpush1.msra.mxu0 0.0
    %1179 = vmatprep.subr.mxu0 0.0
    %1180 = vmatpush1.msra.mxu0 0.0
    %1181 = vmatprep.subr.mxu0 0.0
    %1182 = vmatpush1.msra.mxu0 0.0
    %1183 = vmatprep.subr.mxu0 0.0
    %1184 = vmatpush1.msra.mxu0 0.0
    %1185 = vmatprep.subr.mxu0 0.0
    %1186 = vmatpush1.msra.mxu0 0.0
    %1187 = vmatprep.subr.mxu0 0.0
    %1188 = vmatpush1.msra.mxu0 0.0
    %1189 = vmatprep.subr.mxu0 0.0
    %1190 = vmatpush1.msra.mxu0 0.0
    %1191 = vmatprep.subr.mxu0 0.0
    %1192 = vmatpush1.msra.mxu0 0.0
    %1193 = vmatprep.subr.mxu0 0.0
    %1194 = vmatpush1.msra.mxu0 0.0
    %1195 = vmatprep.subr.mxu0 0.0
    %1196 = vmatpush1.msra.mxu0 0.0
    %1197 = vmatprep.subr.mxu0 0.0
    %1198 = vmatpush1.msra.mxu0 0.0
    %1199 = vmatprep.subr.mxu0 0.0
    %1200 = vmatpush1.msra.mxu0 0.0
    %1201 = vmatprep.subr.mxu0 0.0
    %1202 = vmatpush1.msra.mxu0 0.0
    %1203 = vmatprep.subr.mxu0 0.0
    %1204 = vmatpush1.msra.mxu0 0.0
    %1205 = vmatprep.subr.mxu0 0.0
    %1206 = vmatpush1.msra.mxu0 0.0
    %1207 = vmatprep.subr.mxu0 0.0
    %1208 = vmatpush1.msra.mxu0 0.0
    %1209 = vmatprep.subr.mxu0 0.0
    %1210 = vmatpush1.msra.mxu0 0.0
    %1211 = vmatprep.subr.mxu0 0.0
    %1212 = vmatpush1.msra.mxu0 0.0
    %1213 = vmatprep.subr.mxu0 0.0
    %1214 = vmatpush1.msra.mxu0 0.0
    %1215 = vmatprep.subr.mxu0 0.0
    %1216 = vmatpush1.msra.mxu0 0.0
    %1217 = vmatprep.subr.mxu0 0.0
    %1218 = vmatpush1.msra.mxu0 0.0
    %1219 = vmatprep.subr.mxu0 0.0
    %1220 = vmatpush1.msra.mxu0 0.0
    %1221 = vmatprep.subr.mxu0 0.0
    %1222 = vmatpush1.msra.mxu0 0.0
    %1223 = vmatprep.subr.mxu0 0.0
    %1224 = vmatpush1.msra.mxu0 0.0
    %1225 = vmatprep.subr.mxu0 0.0
    %1226 = vmatpush1.msra.mxu0 0.0
    %1227 = vmatprep.subr.mxu0 0.0
    %1228 = vmatpush1.msra.mxu0 0.0
    %1229 = vmatprep.subr.mxu0 0.0
    %1230 = vmatpush1.msra.mxu0 0.0
    %1231 = vmatprep.mubr.f32.mxu0 0.0
    %1232 = vmatmul.mubr.f32.gmra.mrb[0].mxu0 %v1165
    %v1233 = vpop.f32.mrb[0].mxu0
    %v1234 = vadd.f32 0.0, %v1233
    %v1235 = vpop.f32.mrb[0].mxu0
    %1236 = vdwg.mxu0
    %1237 = vrot.lane.b32.xlu0 %v182, 64
    %v1238 = vpop.permute.xlu0 %1237
    %v1241 = vsel %vm220, %v929, 0
    %1243 = vmatprep.subr.mxu0 0.0
    %1244 = vmatpush1.msra.mxu0 %v1238
    %1245 = vmatprep.subr.mxu0 0.0
    %1246 = vmatpush1.msra.mxu0 0.0
    %1247 = vmatprep.subr.mxu0 0.0
    %1248 = vmatpush1.msra.mxu0 0.0
    %1249 = vmatprep.subr.mxu0 0.0
    %1250 = vmatpush1.msra.mxu0 0.0
    %1251 = vmatprep.subr.mxu0 0.0
    %1252 = vmatpush1.msra.mxu0 0.0
    %1253 = vmatprep.subr.mxu0 0.0
    %1254 = vmatpush1.msra.mxu0 0.0
    %1255 = vmatprep.subr.mxu0 0.0
    %1256 = vmatpush1.msra.mxu0 0.0
    %1257 = vmatprep.subr.mxu0 0.0
    %1258 = vmatpush1.msra.mxu0 0.0
    %1259 = vmatprep.subr.mxu0 0.0
    %1260 = vmatpush1.msra.mxu0 0.0
    %1261 = vmatprep.subr.mxu0 0.0
    %1262 = vmatpush1.msra.mxu0 0.0
    %1263 = vmatprep.subr.mxu0 0.0
    %1264 = vmatpush1.msra.mxu0 0.0
    %1265 = vmatprep.subr.mxu0 0.0
    %1266 = vmatpush1.msra.mxu0 0.0
    %1267 = vmatprep.subr.mxu0 0.0
    %1268 = vmatpush1.msra.mxu0 0.0
    %1269 = vmatprep.subr.mxu0 0.0
    %1270 = vmatpush1.msra.mxu0 0.0
    %1271 = vmatprep.subr.mxu0 0.0
    %1272 = vmatpush1.msra.mxu0 0.0
    %1273 = vmatprep.subr.mxu0 0.0
    %1274 = vmatpush1.msra.mxu0 0.0
    %1275 = vmatprep.subr.mxu0 0.0
    %1276 = vmatpush1.msra.mxu0 0.0
    %1277 = vmatprep.subr.mxu0 0.0
    %1278 = vmatpush1.msra.mxu0 0.0
    %1279 = vmatprep.subr.mxu0 0.0
    %1280 = vmatpush1.msra.mxu0 0.0
    %1281 = vmatprep.subr.mxu0 0.0
    %1282 = vmatpush1.msra.mxu0 0.0
    %1283 = vmatprep.subr.mxu0 0.0
    %1284 = vmatpush1.msra.mxu0 0.0
    %1285 = vmatprep.subr.mxu0 0.0
    %1286 = vmatpush1.msra.mxu0 0.0
    %1287 = vmatprep.subr.mxu0 0.0
    %1288 = vmatpush1.msra.mxu0 0.0
    %1289 = vmatprep.subr.mxu0 0.0
    %1290 = vmatpush1.msra.mxu0 0.0
    %1291 = vmatprep.subr.mxu0 0.0
    %1292 = vmatpush1.msra.mxu0 0.0
    %1293 = vmatprep.subr.mxu0 0.0
    %1294 = vmatpush1.msra.mxu0 0.0
    %1295 = vmatprep.subr.mxu0 0.0
    %1296 = vmatpush1.msra.mxu0 0.0
    %1297 = vmatprep.subr.mxu0 0.0
    %1298 = vmatpush1.msra.mxu0 0.0
    %1299 = vmatprep.subr.mxu0 0.0
    %1300 = vmatpush1.msra.mxu0 0.0
    %1301 = vmatprep.subr.mxu0 0.0
    %1302 = vmatpush1.msra.mxu0 0.0
    %1303 = vmatprep.subr.mxu0 0.0
    %1304 = vmatpush1.msra.mxu0 0.0
    %1305 = vmatprep.subr.mxu0 0.0
    %1306 = vmatpush1.msra.mxu0 0.0
    %1307 = vmatprep.mubr.f32.mxu0 0.0
    %1308 = vmatmul.mubr.f32.gmra.mrb[0].mxu0 %v1241
    %v1309 = vpop.f32.mrb[0].mxu0
    %v1310 = vadd.f32 0.0, %v1309
    %v1311 = vpop.f32.mrb[0].mxu0
    %1312 = vdwg.mxu0
    %1313 = vrot.lane.b32.xlu0 %v190, 64
    %v1314 = vpop.permute.xlu0 %1313
    %v1317 = vsel %vm220, %v930, 0
    %1319 = vmatprep.subr.mxu0 0.0
    %1320 = vmatpush1.msra.mxu0 %v1314
    %1321 = vmatprep.subr.mxu0 0.0
    %1322 = vmatpush1.msra.mxu0 0.0
    %1323 = vmatprep.subr.mxu0 0.0
    %1324 = vmatpush1.msra.mxu0 0.0
    %1325 = vmatprep.subr.mxu0 0.0
    %1326 = vmatpush1.msra.mxu0 0.0
    %1327 = vmatprep.subr.mxu0 0.0
    %1328 = vmatpush1.msra.mxu0 0.0
    %1329 = vmatprep.subr.mxu0 0.0
    %1330 = vmatpush1.msra.mxu0 0.0
    %1331 = vmatprep.subr.mxu0 0.0
    %1332 = vmatpush1.msra.mxu0 0.0
    %1333 = vmatprep.subr.mxu0 0.0
    %1334 = vmatpush1.msra.mxu0 0.0
    %1335 = vmatprep.subr.mxu0 0.0
    %1336 = vmatpush1.msra.mxu0 0.0
    %1337 = vmatprep.subr.mxu0 0.0
    %1338 = vmatpush1.msra.mxu0 0.0
    %1339 = vmatprep.subr.mxu0 0.0
    %1340 = vmatpush1.msra.mxu0 0.0
    %1341 = vmatprep.subr.mxu0 0.0
    %1342 = vmatpush1.msra.mxu0 0.0
    %1343 = vmatprep.subr.mxu0 0.0
    %1344 = vmatpush1.msra.mxu0 0.0
    %1345 = vmatprep.subr.mxu0 0.0
    %1346 = vmatpush1.msra.mxu0 0.0
    %1347 = vmatprep.subr.mxu0 0.0
    %1348 = vmatpush1.msra.mxu0 0.0
    %1349 = vmatprep.subr.mxu0 0.0
    %1350 = vmatpush1.msra.mxu0 0.0
    %1351 = vmatprep.subr.mxu0 0.0
    %1352 = vmatpush1.msra.mxu0 0.0
    %1353 = vmatprep.subr.mxu0 0.0
    %1354 = vmatpush1.msra.mxu0 0.0
    %1355 = vmatprep.subr.mxu0 0.0
    %1356 = vmatpush1.msra.mxu0 0.0
    %1357 = vmatprep.subr.mxu0 0.0
    %1358 = vmatpush1.msra.mxu0 0.0
    %1359 = vmatprep.subr.mxu0 0.0
    %1360 = vmatpush1.msra.mxu0 0.0
    %1361 = vmatprep.subr.mxu0 0.0
    %1362 = vmatpush1.msra.mxu0 0.0
    %1363 = vmatprep.subr.mxu0 0.0
    %1364 = vmatpush1.msra.mxu0 0.0
    %1365 = vmatprep.subr.mxu0 0.0
    %1366 = vmatpush1.msra.mxu0 0.0
    %1367 = vmatprep.subr.mxu0 0.0
    %1368 = vmatpush1.msra.mxu0 0.0
    %1369 = vmatprep.subr.mxu0 0.0
    %1370 = vmatpush1.msra.mxu0 0.0
    %1371 = vmatprep.subr.mxu0 0.0
    %1372 = vmatpush1.msra.mxu0 0.0
    %1373 = vmatprep.subr.mxu0 0.0
    %1374 = vmatpush1.msra.mxu0 0.0
    %1375 = vmatprep.subr.mxu0 0.0
    %1376 = vmatpush1.msra.mxu0 0.0
    %1377 = vmatprep.subr.mxu0 0.0
    %1378 = vmatpush1.msra.mxu0 0.0
    %1379 = vmatprep.subr.mxu0 0.0
    %1380 = vmatpush1.msra.mxu0 0.0
    %1381 = vmatprep.subr.mxu0 0.0
    %1382 = vmatpush1.msra.mxu0 0.0
    %1383 = vmatprep.mubr.f32.mxu0 0.0
    %1384 = vmatmul.mubr.f32.gmra.mrb[0].mxu0 %v1317
    %v1385 = vpop.f32.mrb[0].mxu0
    %v1386 = vadd.f32 0.0, %v1385
    %v1387 = vpop.f32.mrb[0].mxu0
    %1388 = vdwg.mxu0
    %1389 = vrot.lane.b32.xlu0 %v196, 64
    %v1390 = vpop.permute.xlu0 %1389
    %v1393 = vsel %vm220, %v931, 0
    %1395 = vmatprep.subr.mxu0 0.0
    %1396 = vmatpush1.msra.mxu0 %v1390
    %1397 = vmatprep.subr.mxu0 0.0
    %1398 = vmatpush1.msra.mxu0 0.0
    %1399 = vmatprep.subr.mxu0 0.0
    %1400 = vmatpush1.msra.mxu0 0.0
    %1401 = vmatprep.subr.mxu0 0.0
    %1402 = vmatpush1.msra.mxu0 0.0
    %1403 = vmatprep.subr.mxu0 0.0
    %1404 = vmatpush1.msra.mxu0 0.0
    %1405 = vmatprep.subr.mxu0 0.0
    %1406 = vmatpush1.msra.mxu0 0.0
    %1407 = vmatprep.subr.mxu0 0.0
    %1408 = vmatpush1.msra.mxu0 0.0
    %1409 = vmatprep.subr.mxu0 0.0
    %1410 = vmatpush1.msra.mxu0 0.0
    %1411 = vmatprep.subr.mxu0 0.0
    %1412 = vmatpush1.msra.mxu0 0.0
    %1413 = vmatprep.subr.mxu0 0.0
    %1414 = vmatpush1.msra.mxu0 0.0
    %1415 = vmatprep.subr.mxu0 0.0
    %1416 = vmatpush1.msra.mxu0 0.0
    %1417 = vmatprep.subr.mxu0 0.0
    %1418 = vmatpush1.msra.mxu0 0.0
    %1419 = vmatprep.subr.mxu0 0.0
    %1420 = vmatpush1.msra.mxu0 0.0
    %1421 = vmatprep.subr.mxu0 0.0
    %1422 = vmatpush1.msra.mxu0 0.0
    %1423 = vmatprep.subr.mxu0 0.0
    %1424 = vmatpush1.msra.mxu0 0.0
    %1425 = vmatprep.subr.mxu0 0.0
    %1426 = vmatpush1.msra.mxu0 0.0
    %1427 = vmatprep.subr.mxu0 0.0
    %1428 = vmatpush1.msra.mxu0 0.0
    %1429 = vmatprep.subr.mxu0 0.0
    %1430 = vmatpush1.msra.mxu0 0.0
    %1431 = vmatprep.subr.mxu0 0.0
    %1432 = vmatpush1.msra.mxu0 0.0
    %1433 = vmatprep.subr.mxu0 0.0
    %1434 = vmatpush1.msra.mxu0 0.0
    %1435 = vmatprep.subr.mxu0 0.0
    %1436 = vmatpush1.msra.mxu0 0.0
    %1437 = vmatprep.subr.mxu0 0.0
    %1438 = vmatpush1.msra.mxu0 0.0
    %1439 = vmatprep.subr.mxu0 0.0
    %1440 = vmatpush1.msra.mxu0 0.0
    %1441 = vmatprep.subr.mxu0 0.0
    %1442 = vmatpush1.msra.mxu0 0.0
    %1443 = vmatprep.subr.mxu0 0.0
    %1444 = vmatpush1.msra.mxu0 0.0
    %1445 = vmatprep.subr.mxu0 0.0
    %1446 = vmatpush1.msra.mxu0 0.0
    %1447 = vmatprep.subr.mxu0 0.0
    %1448 = vmatpush1.msra.mxu0 0.0
    %1449 = vmatprep.subr.mxu0 0.0
    %1450 = vmatpush1.msra.mxu0 0.0
    %1451 = vmatprep.subr.mxu0 0.0
    %1452 = vmatpush1.msra.mxu0 0.0
    %1453 = vmatprep.subr.mxu0 0.0
    %1454 = vmatpush1.msra.mxu0 0.0
    %1455 = vmatprep.subr.mxu0 0.0
    %1456 = vmatpush1.msra.mxu0 0.0
    %1457 = vmatprep.subr.mxu0 0.0
    %1458 = vmatpush1.msra.mxu0 0.0
    %1459 = vmatprep.mubr.f32.mxu0 0.0
    %1460 = vmatmul.mubr.f32.gmra.mrb[0].mxu0 %v1393
    %v1461 = vpop.f32.mrb[0].mxu0
    %v1462 = vadd.f32 0.0, %v1461
    %v1463 = vpop.f32.mrb[0].mxu0
    %1464 = vdwg.mxu0
    %1465 = vrot.lane.b32.xlu0 %v202, 64
    %v1466 = vpop.permute.xlu0 %1465
    %v1469 = vsel %vm220, %v932, 0
    %1471 = vmatprep.subr.mxu0 0.0
    %1472 = vmatpush1.msra.mxu0 %v1466
    %1473 = vmatprep.subr.mxu0 0.0
    %1474 = vmatpush1.msra.mxu0 0.0
    %1475 = vmatprep.subr.mxu0 0.0
    %1476 = vmatpush1.msra.mxu0 0.0
    %1477 = vmatprep.subr.mxu0 0.0
    %1478 = vmatpush1.msra.mxu0 0.0
    %1479 = vmatprep.subr.mxu0 0.0
    %1480 = vmatpush1.msra.mxu0 0.0
    %1481 = vmatprep.subr.mxu0 0.0
    %1482 = vmatpush1.msra.mxu0 0.0
    %1483 = vmatprep.subr.mxu0 0.0
    %1484 = vmatpush1.msra.mxu0 0.0
    %1485 = vmatprep.subr.mxu0 0.0
    %1486 = vmatpush1.msra.mxu0 0.0
    %1487 = vmatprep.subr.mxu0 0.0
    %1488 = vmatpush1.msra.mxu0 0.0
    %1489 = vmatprep.subr.mxu0 0.0
    %1490 = vmatpush1.msra.mxu0 0.0
    %1491 = vmatprep.subr.mxu0 0.0
    %1492 = vmatpush1.msra.mxu0 0.0
    %1493 = vmatprep.subr.mxu0 0.0
    %1494 = vmatpush1.msra.mxu0 0.0
    %1495 = vmatprep.subr.mxu0 0.0
    %1496 = vmatpush1.msra.mxu0 0.0
    %1497 = vmatprep.subr.mxu0 0.0
    %1498 = vmatpush1.msra.mxu0 0.0
    %1499 = vmatprep.subr.mxu0 0.0
    %1500 = vmatpush1.msra.mxu0 0.0
    %1501 = vmatprep.subr.mxu0 0.0
    %1502 = vmatpush1.msra.mxu0 0.0
    %1503 = vmatprep.subr.mxu0 0.0
    %1504 = vmatpush1.msra.mxu0 0.0
    %1505 = vmatprep.subr.mxu0 0.0
    %1506 = vmatpush1.msra.mxu0 0.0
    %1507 = vmatprep.subr.mxu0 0.0
    %1508 = vmatpush1.msra.mxu0 0.0
    %1509 = vmatprep.subr.mxu0 0.0
    %1510 = vmatpush1.msra.mxu0 0.0
    %1511 = vmatprep.subr.mxu0 0.0
    %1512 = vmatpush1.msra.mxu0 0.0
    %1513 = vmatprep.subr.mxu0 0.0
    %1514 = vmatpush1.msra.mxu0 0.0
    %1515 = vmatprep.subr.mxu0 0.0
    %1516 = vmatpush1.msra.mxu0 0.0
    %1517 = vmatprep.subr.mxu0 0.0
    %1518 = vmatpush1.msra.mxu0 0.0
    %1519 = vmatprep.subr.mxu0 0.0
    %1520 = vmatpush1.msra.mxu0 0.0
    %1521 = vmatprep.subr.mxu0 0.0
    %1522 = vmatpush1.msra.mxu0 0.0
    %1523 = vmatprep.subr.mxu0 0.0
    %1524 = vmatpush1.msra.mxu0 0.0
    %1525 = vmatprep.subr.mxu0 0.0
    %1526 = vmatpush1.msra.mxu0 0.0
    %1527 = vmatprep.subr.mxu0 0.0
    %1528 = vmatpush1.msra.mxu0 0.0
    %1529 = vmatprep.subr.mxu0 0.0
    %1530 = vmatpush1.msra.mxu0 0.0
    %1531 = vmatprep.subr.mxu0 0.0
    %1532 = vmatpush1.msra.mxu0 0.0
    %1533 = vmatprep.subr.mxu0 0.0
    %1534 = vmatpush1.msra.mxu0 0.0
    %1535 = vmatprep.mubr.f32.mxu0 0.0
    %1536 = vmatmul.mubr.f32.gmra.mrb[0].mxu0 %v1469
    %v1537 = vpop.f32.mrb[0].mxu0
    %v1538 = vadd.f32 0.0, %v1537
    %v1539 = vpop.f32.mrb[0].mxu0
    %1540 = vdwg.mxu0
    %1543 = vrot.lane.b32.xlu0 %v1082, 8
    %v1544 = vpop.permute.xlu0 %1543
    %1545 = vrot.lane.b32.xlu0 %v1386, 8
    %v1546 = vpop.permute.xlu0 %1545
    %1551 = vrot.lane.b32.xlu0 %v1158, 16
    %v1552 = vpop.permute.xlu0 %1551
    %1553 = vrot.lane.b32.xlu0 %v1462, 16
    %v1554 = vpop.permute.xlu0 %1553
    %1559 = vrot.lane.b32.xlu0 %v1234, 24
    %v1560 = vpop.permute.xlu0 %1559
    %1561 = vrot.lane.b32.xlu0 %v1538, 24
    %v1562 = vpop.permute.xlu0 %1561
    %v1565 = vsel %vm220, %v1006, %v1544
    %v1566 = vsel %vm220, %v1310, %v1546
    %vm1567 = vcmask 130048
    %v1568 = vsel %vm1567, %v1565, %v1552
    %v1569 = vsel %vm1567, %v1566, %v1554
    %vm1570 = vcmask 195584
    %v1571 = vsel %vm1570, %v1568, %v1560
    %v1572 = vsel %vm1570, %v1569, %v1562
    %v1573 = vld [vmem:[%s5] sm:$0xff]
    %v1574 = vld [vmem:[%s5 + $0x8] sm:$0xff]
    %v1575 = vld [vmem:[%s5 + $0x10] sm:$0xff]
    %v1576 = vld [vmem:[%s5 + $0x18] sm:$0xff]
    %v1577 = vld [vmem:[%s6] sm:$0x1]
    %v1579 = vlaneseq
    %v1580 = vshrl.u32 %v1579, 7
    %v1581 = vsub.s32 0, %v1580
    %v1582 = vrot.slane %v1577, %v1581
    %v1585 = vsel %vm49, %v1571, 0
    %v1588 = vsel %vm49, %v1572, 0
    %1590 = vmatprep.subr.mxu0 0.0
    %1591 = vmatpush1.msra.mxu0 %v1573
    %1592 = vmatprep.subr.mxu0 0.0
    %1593 = vmatpush1.msra.mxu0 %v1574
    %1594 = vmatprep.subr.mxu0 0.0
    %1595 = vmatpush1.msra.mxu0 %v1575
    %1596 = vmatprep.subr.mxu0 0.0
    %1597 = vmatpush1.msra.mxu0 %v1576
    %1598 = vmatprep.subr.mxu0 0.0
    %1599 = vmatpush1.msra.mxu0 0.0
    %1600 = vmatprep.subr.mxu0 0.0
    %1601 = vmatpush1.msra.mxu0 0.0
    %1602 = vmatprep.subr.mxu0 0.0
    %1603 = vmatpush1.msra.mxu0 0.0
    %1604 = vmatprep.subr.mxu0 0.0
    %1605 = vmatpush1.msra.mxu0 0.0
    %1606 = vmatprep.subr.mxu0 0.0
    %1607 = vmatpush1.msra.mxu0 0.0
    %1608 = vmatprep.subr.mxu0 0.0
    %1609 = vmatpush1.msra.mxu0 0.0
    %1610 = vmatprep.subr.mxu0 0.0
    %1611 = vmatpush1.msra.mxu0 0.0
    %1612 = vmatprep.subr.mxu0 0.0
    %1613 = vmatpush1.msra.mxu0 0.0
    %1614 = vmatprep.subr.mxu0 0.0
    %1615 = vmatpush1.msra.mxu0 0.0
    %1616 = vmatprep.subr.mxu0 0.0
    %1617 = vmatpush1.msra.mxu0 0.0
    %1618 = vmatprep.subr.mxu0 0.0
    %1619 = vmatpush1.msra.mxu0 0.0
    %1620 = vmatprep.subr.mxu0 0.0
    %1621 = vmatpush1.msra.mxu0 0.0
    %1622 = vmatprep.subr.mxu0 0.0
    %1623 = vmatpush1.msra.mxu0 0.0
    %1624 = vmatprep.subr.mxu0 0.0
    %1625 = vmatpush1.msra.mxu0 0.0
    %1626 = vmatprep.subr.mxu0 0.0
    %1627 = vmatpush1.msra.mxu0 0.0
    %1628 = vmatprep.subr.mxu0 0.0
    %1629 = vmatpush1.msra.mxu0 0.0
    %1630 = vmatprep.subr.mxu0 0.0
    %1631 = vmatpush1.msra.mxu0 0.0
    %1632 = vmatprep.subr.mxu0 0.0
    %1633 = vmatpush1.msra.mxu0 0.0
    %1634 = vmatprep.subr.mxu0 0.0
    %1635 = vmatpush1.msra.mxu0 0.0
    %1636 = vmatprep.subr.mxu0 0.0
    %1637 = vmatpush1.msra.mxu0 0.0
    %1638 = vmatprep.subr.mxu0 0.0
    %1639 = vmatpush1.msra.mxu0 0.0
    %1640 = vmatprep.subr.mxu0 0.0
    %1641 = vmatpush1.msra.mxu0 0.0
    %1642 = vmatprep.subr.mxu0 0.0
    %1643 = vmatpush1.msra.mxu0 0.0
    %1644 = vmatprep.subr.mxu0 0.0
    %1645 = vmatpush1.msra.mxu0 0.0
    %1646 = vmatprep.subr.mxu0 0.0
    %1647 = vmatpush1.msra.mxu0 0.0
    %1648 = vmatprep.subr.mxu0 0.0
    %1649 = vmatpush1.msra.mxu0 0.0
    %1650 = vmatprep.subr.mxu0 0.0
    %1651 = vmatpush1.msra.mxu0 0.0
    %1652 = vmatprep.subr.mxu0 0.0
    %1653 = vmatpush1.msra.mxu0 0.0
    %1654 = vmatprep.mubr.f32.mxu0 0.0
    %1655 = vmatmul.mubr.f32.gmra.mrb[0].mxu0 %v1585
    %v1656 = vpop.f32.mrb[0].mxu0
    %v1657 = vadd.f32 %v1582, %v1656
    %v1658 = vpop.f32.mrb[0].mxu0
    %1659 = vmatprep.mubr.f32.mxu0 0.0
    %1660 = vmatmul.mubr.f32.gmra.mrb[0].mxu0 %v1588
    %v1661 = vpop.f32.mrb[0].mxu0
    %v1662 = vadd.f32 %v1582, %v1661
    %v1663 = vpop.f32.mrb[0].mxu0
    %1664 = vdwg.mxu0
    %v1665 = vadd.f32 %v45, %v1657
    %v1666 = vadd.f32 %v46, %v1662
    %v1667 = vld [vmem:[%s7] sm:$0x1]
    %v1668 = vld [vmem:[%s8] sm:$0x1]
    %v1669 = vsel %vm49, %v1665, 0.0
    %1670 = vadd.xlane.f32.xlu0 %v1669
    %v1671 = vpop.xlane.xlu0 %1670
    %v1672 = vsel %vm49, %v1666, 0.0
    %1673 = vadd.xlane.f32.xlu0 %v1672
    %v1674 = vpop.xlane.xlu0 %1673
    %v1675 = vmul.f32 %v1671, %v56
    %v1676 = vmul.f32 %v1674, %v56
    %v1677 = vsub.f32 %v1665, %v1675
    %v1678 = vsub.f32 %v1666, %v1676
    %v1679 = vmul.f32 %v1677, %v1677
    %v1680 = vmul.f32 %v1678, %v1678
    %v1681 = vsel %vm49, %v1679, 0.0
    %1682 = vadd.xlane.f32.xlu0 %v1681
    %v1683 = vpop.xlane.xlu0 %1682
    %v1684 = vsel %vm49, %v1680, 0.0
    %1685 = vadd.xlane.f32.xlu0 %v1684
    %v1686 = vpop.xlane.xlu0 %1685
    %v1687 = vmul.f32 %v1683, %v56
    %v1688 = vmul.f32 %v1686, %v56
    %v1689 = vadd.f32 %v1687, 1e-05
    %v1690 = vadd.f32 %v1688, 1e-05
    %v1691 = vrsqrt.pop %v1689
    %v1692 = vrsqrt.pop %v1690
    %v1693 = vmul.f32 %v1677, %v1691
    %v1694 = vmul.f32 %v1678, %v1692
    %v1696 = vlaneseq
    %v1697 = vshrl.u32 %v1696, 7
    %v1698 = vsub.s32 0, %v1697
    %v1699 = vrot.slane %v1667, %v1698
    %v1701 = vmul.f32 %v1693, %v1699
    %v1702 = vmul.f32 %v1694, %v1699
    %v1704 = vlaneseq
    %v1705 = vshrl.u32 %v1704, 7
    %v1706 = vsub.s32 0, %v1705
    %v1707 = vrot.slane %v1668, %v1706
    %v1709 = vadd.f32 %v1701, %v1707
    %v1710 = vadd.f32 %v1702, %v1707
    %v1711 = vld [vmem:[%s9] sm:$0xff]
    %v1712 = vld [vmem:[%s9 + $0x8] sm:$0xff]
    %v1713 = vld [vmem:[%s9 + $0x10] sm:$0xff]
    %v1714 = vld [vmem:[%s9 + $0x18] sm:$0xff]
    %v1715 = vld [vmem:[%s10] sm:$0x1]
    %v1717 = vlaneseq
    %v1718 = vshrl.u32 %v1717, 7
    %v1719 = vsub.s32 0, %v1718
    %v1720 = vrot.slane %v1715, %v1719
    %v1723 = vsel %vm49, %v1709, 0
    %v1726 = vsel %vm49, %v1710, 0
    %1728 = vmatprep.subr.mxu0 0.0
    %1729 = vmatpush1.msra.mxu0 %v1711
    %1730 = vmatprep.subr.mxu0 0.0
    %1731 = vmatpush1.msra.mxu0 %v1712
    %1732 = vmatprep.subr.mxu0 0.0
    %1733 = vmatpush1.msra.mxu0 %v1713
    %1734 = vmatprep.subr.mxu0 0.0
    %1735 = vmatpush1.msra.mxu0 %v1714
    %1736 = vmatprep.subr.mxu0 0.0
    %1737 = vmatpush1.msra.mxu0 0.0
    %1738 = vmatprep.subr.mxu0 0.0
    %1739 = vmatpush1.msra.mxu0 0.0
    %1740 = vmatprep.subr.mxu0 0.0
    %1741 = vmatpush1.msra.mxu0 0.0
    %1742 = vmatprep.subr.mxu0 0.0
    %1743 = vmatpush1.msra.mxu0 0.0
    %1744 = vmatprep.subr.mxu0 0.0
    %1745 = vmatpush1.msra.mxu0 0.0
    %1746 = vmatprep.subr.mxu0 0.0
    %1747 = vmatpush1.msra.mxu0 0.0
    %1748 = vmatprep.subr.mxu0 0.0
    %1749 = vmatpush1.msra.mxu0 0.0
    %1750 = vmatprep.subr.mxu0 0.0
    %1751 = vmatpush1.msra.mxu0 0.0
    %1752 = vmatprep.subr.mxu0 0.0
    %1753 = vmatpush1.msra.mxu0 0.0
    %1754 = vmatprep.subr.mxu0 0.0
    %1755 = vmatpush1.msra.mxu0 0.0
    %1756 = vmatprep.subr.mxu0 0.0
    %1757 = vmatpush1.msra.mxu0 0.0
    %1758 = vmatprep.subr.mxu0 0.0
    %1759 = vmatpush1.msra.mxu0 0.0
    %1760 = vmatprep.subr.mxu0 0.0
    %1761 = vmatpush1.msra.mxu0 0.0
    %1762 = vmatprep.subr.mxu0 0.0
    %1763 = vmatpush1.msra.mxu0 0.0
    %1764 = vmatprep.subr.mxu0 0.0
    %1765 = vmatpush1.msra.mxu0 0.0
    %1766 = vmatprep.subr.mxu0 0.0
    %1767 = vmatpush1.msra.mxu0 0.0
    %1768 = vmatprep.subr.mxu0 0.0
    %1769 = vmatpush1.msra.mxu0 0.0
    %1770 = vmatprep.subr.mxu0 0.0
    %1771 = vmatpush1.msra.mxu0 0.0
    %1772 = vmatprep.subr.mxu0 0.0
    %1773 = vmatpush1.msra.mxu0 0.0
    %1774 = vmatprep.subr.mxu0 0.0
    %1775 = vmatpush1.msra.mxu0 0.0
    %1776 = vmatprep.subr.mxu0 0.0
    %1777 = vmatpush1.msra.mxu0 0.0
    %1778 = vmatprep.subr.mxu0 0.0
    %1779 = vmatpush1.msra.mxu0 0.0
    %1780 = vmatprep.subr.mxu0 0.0
    %1781 = vmatpush1.msra.mxu0 0.0
    %1782 = vmatprep.subr.mxu0 0.0
    %1783 = vmatpush1.msra.mxu0 0.0
    %1784 = vmatprep.subr.mxu0 0.0
    %1785 = vmatpush1.msra.mxu0 0.0
    %1786 = vmatprep.subr.mxu0 0.0
    %1787 = vmatpush1.msra.mxu0 0.0
    %1788 = vmatprep.subr.mxu0 0.0
    %1789 = vmatpush1.msra.mxu0 0.0
    %1790 = vmatprep.subr.mxu0 0.0
    %1791 = vmatpush1.msra.mxu0 0.0
    %1792 = vmatprep.mubr.f32.mxu0 0.0
    %1793 = vmatmul.mubr.f32.gmra.mrb[0].mxu0 %v1723
    %v1794 = vpop.f32.mrb[0].mxu0
    %v1795 = vadd.f32 %v1720, %v1794
    %v1796 = vpop.f32.mrb[0].mxu0
    %1797 = vmatprep.mubr.f32.mxu0 0.0
    %1798 = vmatmul.mubr.f32.gmra.mrb[0].mxu0 %v1726
    %v1799 = vpop.f32.mrb[0].mxu0
    %v1800 = vadd.f32 %v1720, %v1799
    %v1801 = vpop.f32.mrb[0].mxu0
    %1802 = vdwg.mxu0
    %v1803 = vmul.f32 %v1795, 0.5
    %v1804 = vmul.f32 %v1800, 0.5
    %v1805 = vmul.f32 %v1795, 0.044715
    %v1806 = vmul.f32 %v1800, 0.044715
    %v1807 = vmul.f32 %v1805, %v1795
    %v1808 = vmul.f32 %v1806, %v1800
    %v1809 = vmul.f32 %v1807, %v1795
    %v1810 = vmul.f32 %v1808, %v1800
    %v1811 = vadd.f32 %v1795, %v1809
    %v1812 = vadd.f32 %v1800, %v1810
    %v1813 = vmul.f32 %v1811, 0.7978846
    %v1814 = vmul.f32 %v1812, 0.7978846
    %v1815 = vtanh.pop %v1813
    %v1816 = vtanh.pop %v1814
    %v1817 = vadd.f32 %v1815, 1.0
    %v1818 = vadd.f32 %v1816, 1.0
    %v1819 = vmul.f32 %v1803, %v1817
    %v1820 = vmul.f32 %v1804, %v1818
    %v1821 = vld [vmem:[%s11] sm:$0xff]
    %v1822 = vld [vmem:[%s11 + $0x8] sm:$0xff]
    %v1823 = vld [vmem:[%s11 + $0x10] sm:$0xff]
    %v1824 = vld [vmem:[%s11 + $0x18] sm:$0xff]
    %v1825 = vld [vmem:[%s11 + $0x20] sm:$0xff]
    %v1826 = vld [vmem:[%s11 + $0x28] sm:$0xff]
    %v1827 = vld [vmem:[%s11 + $0x30] sm:$0xff]
    %v1828 = vld [vmem:[%s11 + $0x38] sm:$0xff]
    %v1829 = vld [vmem:[%s11 + $0x40] sm:$0xff]
    %v1830 = vld [vmem:[%s11 + $0x48] sm:$0xff]
    %v1831 = vld [vmem:[%s11 + $0x50] sm:$0xff]
    %v1832 = vld [vmem:[%s11 + $0x58] sm:$0xff]
    %v1833 = vld [vmem:[%s11 + $0x60] sm:$0xff]
    %v1834 = vld [vmem:[%s11 + $0x68] sm:$0xff]
    %v1835 = vld [vmem:[%s11 + $0x70] sm:$0xff]
    %v1836 = vld [vmem:[%s11 + $0x78] sm:$0xff]
    %v1837 = vld [vmem:[%s12] sm:$0x1]
    %v1839 = vlaneseq
    %v1840 = vshrl.u32 %v1839, 7
    %v1841 = vsub.s32 0, %v1840
    %v1842 = vrot.slane %v1837, %v1841
    %1844 = vmatprep.subr.mxu0 0.0
    %1845 = vmatpush1.msra.mxu0 %v1821
    %1846 = vmatprep.subr.mxu0 0.0
    %1847 = vmatpush1.msra.mxu0 %v1822
    %1848 = vmatprep.subr.mxu0 0.0
    %1849 = vmatpush1.msra.mxu0 %v1823
    %1850 = vmatprep.subr.mxu0 0.0
    %1851 = vmatpush1.msra.mxu0 %v1824
    %1852 = vmatprep.subr.mxu0 0.0
    %1853 = vmatpush1.msra.mxu0 %v1825
    %1854 = vmatprep.subr.mxu0 0.0
    %1855 = vmatpush1.msra.mxu0 %v1826
    %1856 = vmatprep.subr.mxu0 0.0
    %1857 = vmatpush1.msra.mxu0 %v1827
    %1858 = vmatprep.subr.mxu0 0.0
    %1859 = vmatpush1.msra.mxu0 %v1828
    %1860 = vmatprep.subr.mxu0 0.0
    %1861 = vmatpush1.msra.mxu0 %v1829
    %1862 = vmatprep.subr.mxu0 0.0
    %1863 = vmatpush1.msra.mxu0 %v1830
    %1864 = vmatprep.subr.mxu0 0.0
    %1865 = vmatpush1.msra.mxu0 %v1831
    %1866 = vmatprep.subr.mxu0 0.0
    %1867 = vmatpush1.msra.mxu0 %v1832
    %1868 = vmatprep.subr.mxu0 0.0
    %1869 = vmatpush1.msra.mxu0 %v1833
    %1870 = vmatprep.subr.mxu0 0.0
    %1871 = vmatpush1.msra.mxu0 %v1834
    %1872 = vmatprep.subr.mxu0 0.0
    %1873 = vmatpush1.msra.mxu0 %v1835
    %1874 = vmatprep.subr.mxu0 0.0
    %1875 = vmatpush1.msra.mxu0 %v1836
    %1876 = vmatprep.subr.mxu0 0.0
    %1877 = vmatpush1.msra.mxu0 0.0
    %1878 = vmatprep.subr.mxu0 0.0
    %1879 = vmatpush1.msra.mxu0 0.0
    %1880 = vmatprep.subr.mxu0 0.0
    %1881 = vmatpush1.msra.mxu0 0.0
    %1882 = vmatprep.subr.mxu0 0.0
    %1883 = vmatpush1.msra.mxu0 0.0
    %1884 = vmatprep.subr.mxu0 0.0
    %1885 = vmatpush1.msra.mxu0 0.0
    %1886 = vmatprep.subr.mxu0 0.0
    %1887 = vmatpush1.msra.mxu0 0.0
    %1888 = vmatprep.subr.mxu0 0.0
    %1889 = vmatpush1.msra.mxu0 0.0
    %1890 = vmatprep.subr.mxu0 0.0
    %1891 = vmatpush1.msra.mxu0 0.0
    %1892 = vmatprep.subr.mxu0 0.0
    %1893 = vmatpush1.msra.mxu0 0.0
    %1894 = vmatprep.subr.mxu0 0.0
    %1895 = vmatpush1.msra.mxu0 0.0
    %1896 = vmatprep.subr.mxu0 0.0
    %1897 = vmatpush1.msra.mxu0 0.0
    %1898 = vmatprep.subr.mxu0 0.0
    %1899 = vmatpush1.msra.mxu0 0.0
    %1900 = vmatprep.subr.mxu0 0.0
    %1901 = vmatpush1.msra.mxu0 0.0
    %1902 = vmatprep.subr.mxu0 0.0
    %1903 = vmatpush1.msra.mxu0 0.0
    %1904 = vmatprep.subr.mxu0 0.0
    %1905 = vmatpush1.msra.mxu0 0.0
    %1906 = vmatprep.subr.mxu0 0.0
    %1907 = vmatpush1.msra.mxu0 0.0
    %1908 = vmatprep.mubr.f32.mxu0 0.0
    %1909 = vmatmul.mubr.f32.gmra.mrb[0].mxu0 %v1819
    %v1910 = vpop.f32.mrb[0].mxu0
    %v1911 = vadd.f32 %v1842, %v1910
    %v1912 = vpop.f32.mrb[0].mxu0
    %1913 = vmatprep.mubr.f32.mxu0 0.0
    %1914 = vmatmul.mubr.f32.gmra.mrb[0].mxu0 %v1820
    %v1915 = vpop.f32.mrb[0].mxu0
    %v1916 = vadd.f32 %v1842, %v1915
    %v1917 = vpop.f32.mrb[0].mxu0
    %1918 = vdwg.mxu0
    %v1919 = vadd.f32 %v1665, %v1911
    %v1920 = vadd.f32 %v1666, %v1916
    %1921 = vst.msk [vmem:[#allocation2] sm:$0xff] %vm49, %v1919
    %1922 = vst.msk [vmem:[#allocation2 + $0x8] sm:$0xff] %vm49, %v1920
    // Predicated region
    $region54: #{tpu_custom_call.1} parent=1 // pred_check
      _
    $region55: #{tpu_custom_call.1} parent=1 // pred_check_branch
      %1924 = sbr.rel (0) target = $region57
    $region56: #{tpu_custom_call.1} parent=1 // pred_region
      %s1926 = ssub.s32 256, 256
      %1927 = vsyncadd [#allocation3], %s1926
      %s1928 = sshll.u32 [#allocation2], 4
      %s1929 = int_to_ptr.vmem [resolvable:$true] %s1928
      %1934 = dma.vmem_to_hbm [thread:$0]  %s1929, 256, %s13, [#allocation3], 128, 128, 8
    $region57: #{tpu_custom_call.1} parent=1 // pred_fallthru
      _
    // Predicated region
    $region58: #{tpu_custom_call.1} parent=1 // pred_check
      _
    $region59: #{tpu_custom_call.1} parent=1 // pred_check_branch
      %1936 = sbr.rel (0) target = $region61
    $region60: #{tpu_custom_call.1} parent=1 // pred_region
      %1937 = dma.done [#allocation3], 256
    $region61: #{tpu_custom_call.1} parent=1 // pred_fallthru
      _
    %1938 = vsyncpa [#allocation3], 1

</llo_original>
